<compile_context>
chip_gen: v6e
topology: v6e:2x2x1
jax: 0.10.0
libtpu: 0.0.40
codegen_flags: <defaults>
</compile_context>

<pallas_src>
import functools

import jax
import jax.numpy as jnp
import numpy as np
from jax import lax
from jax.experimental import pallas as pl
from jax.experimental.pallas import tpu as pltpu


def _round_up(v, m):
    return (v + m - 1) // m * m


def _lstm_recurrence_kernel(gx_ref, whh_ref, hout_ref, h_sc, c_sc, *,
                            hidden_pad, time_chunk):
    """One program == one chunk of `time_chunk` LSTM time steps.

    gx_ref:   (TT, B, 4*Hp)  precomputed x@W_ih^T + bias for this chunk
    whh_ref:  (Hp, 4*Hp)     recurrent weight, right-multiply layout
    hout_ref: (B, Hp)        last hidden state (written on the final chunk)
    h_sc/c_sc:(B, Hp)        recurrent state carried across chunks
    """
    step = pl.program_id(0)

    @pl.when(step == 0)
    def _():
        h_sc[...] = jnp.zeros_like(h_sc)
        c_sc[...] = jnp.zeros_like(c_sc)

    Hp = hidden_pad
    whh = whh_ref[...]                       # hoisted: loaded once per chunk

    def body(t, carry):
        h, c = carry
        # Only the recurrent matmul remains inside the serial loop.
        gates = gx_ref[t] + jnp.dot(h, whh, preferred_element_type=jnp.float32)
        # Gate slices are aligned to 128-lane tiles (Hp % 128 == 0).
        i_g = jax.nn.sigmoid(gates[:, 0 * Hp:1 * Hp])
        f_g = jax.nn.sigmoid(gates[:, 1 * Hp:2 * Hp])
        g_g = jnp.tanh(gates[:, 2 * Hp:3 * Hp])
        o_g = jax.nn.sigmoid(gates[:, 3 * Hp:4 * Hp])
        c = f_g * c + i_g * g_g
        h = o_g * jnp.tanh(c)
        return h, c

    h, c = lax.fori_loop(0, time_chunk, body, (h_sc[...], c_sc[...]),
                         unroll=True)
    h_sc[...] = h                            # one state writeback per chunk
    c_sc[...] = c

    @pl.when(step == pl.num_programs(0) - 1)
    def _():
        hout_ref[...] = h.astype(hout_ref.dtype)


def lstm_model_forward(x, w_ih, w_hh, b_ih, b_hh, fc_w, fc_b, *,
                       time_chunk=None):
    """LSTMModel.forward: x (B, T, I) -> (B, O)."""
    B, T, I = x.shape
    H = w_hh.shape[1]
    Hp = max(_round_up(H, 128), 128)

    # --- pad hidden dim (per gate) to a lane-tile multiple; zeros are exact. -
    def pad_gate_rows(w):                     # (4H, ...) -> (4Hp, ...)
        w4 = w.reshape(4, H, *w.shape[1:])
        w4 = jnp.pad(w4, ((0, 0), (0, Hp - H)) + ((0, 0),) * (w.ndim - 1))
        return w4.reshape(4 * Hp, *w.shape[1:])

    w_ih_p = pad_gate_rows(w_ih)                                    # (4Hp, I)
    w_hh_p = pad_gate_rows(w_hh)                                    # (4Hp, H)
    w_hh_p = jnp.pad(w_hh_p, ((0, 0), (0, Hp - H)))                 # (4Hp, Hp)
    bias_p = pad_gate_rows((b_ih + b_hh).reshape(4 * H, 1))[:, 0]   # (4Hp,)

    # --- hoisted input projection: one big matmul, bias folded in. ----------
    # gates_x[t, b, :] = x[b, t, :] @ W_ih^T + (b_ih + b_hh)
    gates_x = (jnp.einsum("bti,gi->tbg",
                          x.astype(jnp.float32), w_ih_p.astype(jnp.float32))
               + bias_p.astype(jnp.float32))                        # (T,B,4Hp)
    whh_t = jnp.transpose(w_hh_p).astype(jnp.float32)               # (Hp,4Hp)

    # --- time chunking: grid over chunks, unrolled recurrence inside. -------
    if time_chunk is None:
        time_chunk = min(T, 16)
    while T % time_chunk:
        time_chunk -= 1
    num_chunks = T // time_chunk

    kernel = functools.partial(_lstm_recurrence_kernel,
                               hidden_pad=Hp, time_chunk=time_chunk)

    h_last = pl.pallas_call(
        kernel,
        out_shape=jax.ShapeDtypeStruct((B, Hp), jnp.float32),
        grid_spec=pltpu.PrefetchScalarGridSpec(
            num_scalar_prefetch=0,
            grid=(num_chunks,),
            in_specs=[
                # per-chunk slab of precomputed gate inputs
                pl.BlockSpec((time_chunk, B, 4 * Hp), lambda s: (s, 0, 0)),
                # recurrent weight, constant index across the grid
                pl.BlockSpec((Hp, 4 * Hp), lambda s: (0, 0)),
            ],
            out_specs=pl.BlockSpec((B, Hp), lambda s: (0, 0)),
            scratch_shapes=[
                pltpu.VMEM((B, Hp), jnp.float32),   # h state
                pltpu.VMEM((B, Hp), jnp.float32),   # c state
            ],
        ),
        compiler_params=pltpu.CompilerParams(
            dimension_semantics=("arbitrary",),     # time recurrence is serial
        ),
    )(gates_x, whh_t)

    # --- fc head in XLA on the (unpadded) last hidden state. ----------------
    return (h_last[:, :H] @ fc_w.T + fc_b).astype(x.dtype)


def _reference_forward(x, w_ih, w_hh, b_ih, b_hh, fc_w, fc_b):
    """Pure-JAX reference mirroring torch.nn.LSTM (batch_first) + Linear."""
    B, T, I = x.shape
    H = w_hh.shape[1]

    def step(carry, x_t):
        h, c = carry
        gates = x_t @ w_ih.T + h @ w_hh.T + b_ih + b_hh
        i_g = jax.nn.sigmoid(gates[:, 0 * H:1 * H])
        f_g = jax.nn.sigmoid(gates[:, 1 * H:2 * H])
        g_g = jnp.tanh(gates[:, 2 * H:3 * H])
        o_g = jax.nn.sigmoid(gates[:, 3 * H:4 * H])
        c = f_g * c + i_g * g_g
        h = o_g * jnp.tanh(c)
        return (h, c), h

    init = (jnp.zeros((B, H), x.dtype), jnp.zeros((B, H), x.dtype))
    (h_last, _), _ = jax.lax.scan(step, init, jnp.transpose(x, (1, 0, 2)))
    return h_last @ fc_w.T + fc_b


if __name__ == "__main__":
    # Small shapes consistent with the module's forward.
    batch, seq_len = 2, 8
    input_size, hidden_size, output_size = 16, 32, 8

    key = jax.random.PRNGKey(0)
    ks = jax.random.split(key, 8)
    scale = 1.0 / np.sqrt(hidden_size)

    x = jax.random.normal(ks[0], (batch, seq_len, input_size), jnp.float32)
    w_ih = jax.random.uniform(ks[1], (4 * hidden_size, input_size),
                              jnp.float32, -scale, scale)
    w_hh = jax.random.uniform(ks[2], (4 * hidden_size, hidden_size),
                              jnp.float32, -scale, scale)
    b_ih = jax.random.uniform(ks[3], (4 * hidden_size,), jnp.float32, -scale, scale)
    b_hh = jax.random.uniform(ks[4], (4 * hidden_size,), jnp.float32, -scale, scale)
    fc_w = jax.random.uniform(ks[5], (output_size, hidden_size),
                              jnp.float32, -scale, scale)
    fc_b = jax.random.uniform(ks[6], (output_size,), jnp.float32, -scale, scale)

    out = lstm_model_forward(x, w_ih, w_hh, b_ih, b_hh, fc_w, fc_b)
    out = jax.block_until_ready(out)

    ref = _reference_forward(x, w_ih, w_hh, b_ih, b_hh, fc_w, fc_b)
    np.testing.assert_allclose(np.asarray(out), np.asarray(ref),
                               rtol=1e-4, atol=1e-4)

    print("KERNEL_OK")
</pallas_src>

<mosaic_0001>
module attributes {stable_mosaic.version = 11 : i64} {
  func.func @_lstm_recurrence_kernel(%arg0: i32, %arg1: memref<8x2x512xf32, #tpu.memory_space<vmem>>, %arg2: memref<128x512xf32, #tpu.memory_space<vmem>>, %arg3: memref<2x128xf32, #tpu.memory_space<vmem>>, %arg4: memref<2x128xf32, #tpu.memory_space<vmem>>, %arg5: memref<2x128xf32, #tpu.memory_space<vmem>>) attributes {dimension_semantics = [#tpu.dimension_semantics<arbitrary>], iteration_bounds = array<i64: 1>, scalar_prefetch = 0 : i64, scratch_operands = 2 : i64, tpu.core_type = #tpu.core_type<tc>, window_params = [{transform_indices = @transform_0, window_bounds = array<i64: 8, 2, 512>}, {pipeline_mode = #tpu.pipeline_mode<synchronous>, transform_indices = @transform_1, window_bounds = array<i64: 128, 512>}, {pipeline_mode = #tpu.pipeline_mode<synchronous>, transform_indices = @transform_2, window_bounds = array<i64: 2, 128>}]} {
    %c0_i32 = arith.constant 0 : i32
    %0 = arith.cmpi eq, %arg0, %c0_i32 : i32
    %1 = arith.extui %0 : i1 to i32
    %c0_i32_0 = arith.constant 0 : i32
    %2 = arith.cmpi ne, %1, %c0_i32_0 : i32
    scf.if %2 {
      %cst_60 = arith.constant 0.000000e+00 : f32
      %251 = vector.broadcast %cst_60 : f32 to vector<2x128xf32>
      %c0_61 = arith.constant 0 : index
      %c0_62 = arith.constant 0 : index
      %252 = vector.load %arg4[%c0_61, %c0_62] : memref<2x128xf32, #tpu.memory_space<vmem>>, vector<2x128xf32>
      tpu.vector_store %arg4[%c0_61, %c0_62], %251 {strides = array<i32>} : memref<2x128xf32, #tpu.memory_space<vmem>>, vector<2x128xf32>,
      %cst_63 = arith.constant 0.000000e+00 : f32
      %253 = vector.broadcast %cst_63 : f32 to vector<2x128xf32>
      %c0_64 = arith.constant 0 : index
      %c0_65 = arith.constant 0 : index
      %254 = vector.load %arg5[%c0_64, %c0_65] : memref<2x128xf32, #tpu.memory_space<vmem>>, vector<2x128xf32>
      tpu.vector_store %arg5[%c0_64, %c0_65], %253 {strides = array<i32>} : memref<2x128xf32, #tpu.memory_space<vmem>>, vector<2x128xf32>,
    } else {
    }
    %c0 = arith.constant 0 : index
    %c0_1 = arith.constant 0 : index
    %3 = vector.load %arg2[%c0, %c0_1] : memref<128x512xf32, #tpu.memory_space<vmem>>, vector<128x512xf32>
    %c0_2 = arith.constant 0 : index
    %c0_3 = arith.constant 0 : index
    %4 = vector.load %arg4[%c0_2, %c0_3] : memref<2x128xf32, #tpu.memory_space<vmem>>, vector<2x128xf32>
    %c0_4 = arith.constant 0 : index
    %c0_5 = arith.constant 0 : index
    %5 = vector.load %arg5[%c0_4, %c0_5] : memref<2x128xf32, #tpu.memory_space<vmem>>, vector<2x128xf32>
    %c0_i32_6 = arith.constant 0 : i32
    %6 = arith.index_cast %c0_i32_6 : i32 to index
    %c0_7 = arith.constant 0 : index
    %c0_8 = arith.constant 0 : index
    %7 = vector.load %arg1[%6, %c0_7, %c0_8] : memref<8x2x512xf32, #tpu.memory_space<vmem>>, vector<1x2x512xf32>
    %8 = vector.shape_cast %7 : vector<1x2x512xf32> to vector<2x512xf32>
    %cst = arith.constant dense<0.000000e+00> : vector<2x512xf32>
    %9 = tpu.matmul %4, %3, %cst {dimension_numbers = #tpu.dot_dimension_numbers<[1], [0], [0], [1], [0, 0, 1, 1], [], []>} : vector<2x128xf32>, vector<128x512xf32>, vector<2x512xf32> -> vector<2x512xf32>
    %10 = arith.addf %8, %9 : vector<2x512xf32>
    %11 = vector.extract_strided_slice %10 {offsets = [0, 0], sizes = [2, 128], strides = [1, 1]} : vector<2x512xf32> to vector<2x128xf32>
    %12 = arith.negf %11 : vector<2x128xf32>
    %13 = math.exp %12 : vector<2x128xf32>
    %cst_9 = arith.constant 1.000000e+00 : f32
    %14 = vector.broadcast %cst_9 : f32 to vector<2x128xf32>
    %15 = arith.addf %14, %13 : vector<2x128xf32>
    %16 = arith.divf %14, %15 : vector<2x128xf32>
    %17 = vector.extract_strided_slice %10 {offsets = [0, 128], sizes = [2, 128], strides = [1, 1]} : vector<2x512xf32> to vector<2x128xf32>
    %18 = arith.negf %17 : vector<2x128xf32>
    %19 = math.exp %18 : vector<2x128xf32>
    %cst_10 = arith.constant 1.000000e+00 : f32
    %20 = vector.broadcast %cst_10 : f32 to vector<2x128xf32>
    %21 = arith.addf %20, %19 : vector<2x128xf32>
    %22 = arith.divf %20, %21 : vector<2x128xf32>
    %23 = vector.extract_strided_slice %10 {offsets = [0, 256], sizes = [2, 128], strides = [1, 1]} : vector<2x512xf32> to vector<2x128xf32>
    %24 = math.tanh %23 : vector<2x128xf32>
    %25 = vector.extract_strided_slice %10 {offsets = [0, 384], sizes = [2, 128], strides = [1, 1]} : vector<2x512xf32> to vector<2x128xf32>
    %26 = arith.negf %25 : vector<2x128xf32>
    %27 = math.exp %26 : vector<2x128xf32>
    %cst_11 = arith.constant 1.000000e+00 : f32
    %28 = vector.broadcast %cst_11 : f32 to vector<2x128xf32>
    %29 = arith.addf %28, %27 : vector<2x128xf32>
    %30 = arith.divf %28, %29 : vector<2x128xf32>
    %31 = arith.mulf %22, %5 : vector<2x128xf32>
    %32 = arith.mulf %16, %24 : vector<2x128xf32>
    %33 = arith.addf %31, %32 : vector<2x128xf32>
    %34 = math.tanh %33 : vector<2x128xf32>
    %35 = arith.mulf %30, %34 : vector<2x128xf32>
    %c1_i32 = arith.constant 1 : i32
    %36 = arith.index_cast %c1_i32 : i32 to index
    %c0_12 = arith.constant 0 : index
    %c0_13 = arith.constant 0 : index
    %37 = vector.load %arg1[%36, %c0_12, %c0_13] : memref<8x2x512xf32, #tpu.memory_space<vmem>>, vector<1x2x512xf32>
    %38 = vector.shape_cast %37 : vector<1x2x512xf32> to vector<2x512xf32>
    %cst_14 = arith.constant dense<0.000000e+00> : vector<2x512xf32>
    %39 = tpu.matmul %35, %3, %cst_14 {dimension_numbers = #tpu.dot_dimension_numbers<[1], [0], [0], [1], [0, 0, 1, 1], [], []>} : vector<2x128xf32>, vector<128x512xf32>, vector<2x512xf32> -> vector<2x512xf32>
    %40 = arith.addf %38, %39 : vector<2x512xf32>
    %41 = vector.extract_strided_slice %40 {offsets = [0, 0], sizes = [2, 128], strides = [1, 1]} : vector<2x512xf32> to vector<2x128xf32>
    %42 = arith.negf %41 : vector<2x128xf32>
    %43 = math.exp %42 : vector<2x128xf32>
    %cst_15 = arith.constant 1.000000e+00 : f32
    %44 = vector.broadcast %cst_15 : f32 to vector<2x128xf32>
    %45 = arith.addf %44, %43 : vector<2x128xf32>
    %46 = arith.divf %44, %45 : vector<2x128xf32>
    %47 = vector.extract_strided_slice %40 {offsets = [0, 128], sizes = [2, 128], strides = [1, 1]} : vector<2x512xf32> to vector<2x128xf32>
    %48 = arith.negf %47 : vector<2x128xf32>
    %49 = math.exp %48 : vector<2x128xf32>
    %cst_16 = arith.constant 1.000000e+00 : f32
    %50 = vector.broadcast %cst_16 : f32 to vector<2x128xf32>
    %51 = arith.addf %50, %49 : vector<2x128xf32>
    %52 = arith.divf %50, %51 : vector<2x128xf32>
    %53 = vector.extract_strided_slice %40 {offsets = [0, 256], sizes = [2, 128], strides = [1, 1]} : vector<2x512xf32> to vector<2x128xf32>
    %54 = math.tanh %53 : vector<2x128xf32>
    %55 = vector.extract_strided_slice %40 {offsets = [0, 384], sizes = [2, 128], strides = [1, 1]} : vector<2x512xf32> to vector<2x128xf32>
    %56 = arith.negf %55 : vector<2x128xf32>
    %57 = math.exp %56 : vector<2x128xf32>
    %cst_17 = arith.constant 1.000000e+00 : f32
    %58 = vector.broadcast %cst_17 : f32 to vector<2x128xf32>
    %59 = arith.addf %58, %57 : vector<2x128xf32>
    %60 = arith.divf %58, %59 : vector<2x128xf32>
    %61 = arith.mulf %52, %33 : vector<2x128xf32>
    %62 = arith.mulf %46, %54 : vector<2x128xf32>
    %63 = arith.addf %61, %62 : vector<2x128xf32>
    %64 = math.tanh %63 : vector<2x128xf32>
    %65 = arith.mulf %60, %64 : vector<2x128xf32>
    %c2_i32 = arith.constant 2 : i32
    %66 = arith.index_cast %c2_i32 : i32 to index
    %c0_18 = arith.constant 0 : index
    %c0_19 = arith.constant 0 : index
    %67 = vector.load %arg1[%66, %c0_18, %c0_19] : memref<8x2x512xf32, #tpu.memory_space<vmem>>, vector<1x2x512xf32>
    %68 = vector.shape_cast %67 : vector<1x2x512xf32> to vector<2x512xf32>
    %cst_20 = arith.constant dense<0.000000e+00> : vector<2x512xf32>
    %69 = tpu.matmul %65, %3, %cst_20 {dimension_numbers = #tpu.dot_dimension_numbers<[1], [0], [0], [1], [0, 0, 1, 1], [], []>} : vector<2x128xf32>, vector<128x512xf32>, vector<2x512xf32> -> vector<2x512xf32>
    %70 = arith.addf %68, %69 : vector<2x512xf32>
    %71 = vector.extract_strided_slice %70 {offsets = [0, 0], sizes = [2, 128], strides = [1, 1]} : vector<2x512xf32> to vector<2x128xf32>
    %72 = arith.negf %71 : vector<2x128xf32>
    %73 = math.exp %72 : vector<2x128xf32>
    %cst_21 = arith.constant 1.000000e+00 : f32
    %74 = vector.broadcast %cst_21 : f32 to vector<2x128xf32>
    %75 = arith.addf %74, %73 : vector<2x128xf32>
    %76 = arith.divf %74, %75 : vector<2x128xf32>
    %77 = vector.extract_strided_slice %70 {offsets = [0, 128], sizes = [2, 128], strides = [1, 1]} : vector<2x512xf32> to vector<2x128xf32>
    %78 = arith.negf %77 : vector<2x128xf32>
    %79 = math.exp %78 : vector<2x128xf32>
    %cst_22 = arith.constant 1.000000e+00 : f32
    %80 = vector.broadcast %cst_22 : f32 to vector<2x128xf32>
    %81 = arith.addf %80, %79 : vector<2x128xf32>
    %82 = arith.divf %80, %81 : vector<2x128xf32>
    %83 = vector.extract_strided_slice %70 {offsets = [0, 256], sizes = [2, 128], strides = [1, 1]} : vector<2x512xf32> to vector<2x128xf32>
    %84 = math.tanh %83 : vector<2x128xf32>
    %85 = vector.extract_strided_slice %70 {offsets = [0, 384], sizes = [2, 128], strides = [1, 1]} : vector<2x512xf32> to vector<2x128xf32>
    %86 = arith.negf %85 : vector<2x128xf32>
    %87 = math.exp %86 : vector<2x128xf32>
    %cst_23 = arith.constant 1.000000e+00 : f32
    %88 = vector.broadcast %cst_23 : f32 to vector<2x128xf32>
    %89 = arith.addf %88, %87 : vector<2x128xf32>
    %90 = arith.divf %88, %89 : vector<2x128xf32>
    %91 = arith.mulf %82, %63 : vector<2x128xf32>
    %92 = arith.mulf %76, %84 : vector<2x128xf32>
    %93 = arith.addf %91, %92 : vector<2x128xf32>
    %94 = math.tanh %93 : vector<2x128xf32>
    %95 = arith.mulf %90, %94 : vector<2x128xf32>
    %c3_i32 = arith.constant 3 : i32
    %96 = arith.index_cast %c3_i32 : i32 to index
    %c0_24 = arith.constant 0 : index
    %c0_25 = arith.constant 0 : index
    %97 = vector.load %arg1[%96, %c0_24, %c0_25] : memref<8x2x512xf32, #tpu.memory_space<vmem>>, vector<1x2x512xf32>
    %98 = vector.shape_cast %97 : vector<1x2x512xf32> to vector<2x512xf32>
    %cst_26 = arith.constant dense<0.000000e+00> : vector<2x512xf32>
    %99 = tpu.matmul %95, %3, %cst_26 {dimension_numbers = #tpu.dot_dimension_numbers<[1], [0], [0], [1], [0, 0, 1, 1], [], []>} : vector<2x128xf32>, vector<128x512xf32>, vector<2x512xf32> -> vector<2x512xf32>
    %100 = arith.addf %98, %99 : vector<2x512xf32>
    %101 = vector.extract_strided_slice %100 {offsets = [0, 0], sizes = [2, 128], strides = [1, 1]} : vector<2x512xf32> to vector<2x128xf32>
    %102 = arith.negf %101 : vector<2x128xf32>
    %103 = math.exp %102 : vector<2x128xf32>
    %cst_27 = arith.constant 1.000000e+00 : f32
    %104 = vector.broadcast %cst_27 : f32 to vector<2x128xf32>
    %105 = arith.addf %104, %103 : vector<2x128xf32>
    %106 = arith.divf %104, %105 : vector<2x128xf32>
    %107 = vector.extract_strided_slice %100 {offsets = [0, 128], sizes = [2, 128], strides = [1, 1]} : vector<2x512xf32> to vector<2x128xf32>
    %108 = arith.negf %107 : vector<2x128xf32>
    %109 = math.exp %108 : vector<2x128xf32>
    %cst_28 = arith.constant 1.000000e+00 : f32
    %110 = vector.broadcast %cst_28 : f32 to vector<2x128xf32>
    %111 = arith.addf %110, %109 : vector<2x128xf32>
    %112 = arith.divf %110, %111 : vector<2x128xf32>
    %113 = vector.extract_strided_slice %100 {offsets = [0, 256], sizes = [2, 128], strides = [1, 1]} : vector<2x512xf32> to vector<2x128xf32>
    %114 = math.tanh %113 : vector<2x128xf32>
    %115 = vector.extract_strided_slice %100 {offsets = [0, 384], sizes = [2, 128], strides = [1, 1]} : vector<2x512xf32> to vector<2x128xf32>
    %116 = arith.negf %115 : vector<2x128xf32>
    %117 = math.exp %116 : vector<2x128xf32>
    %cst_29 = arith.constant 1.000000e+00 : f32
    %118 = vector.broadcast %cst_29 : f32 to vector<2x128xf32>
    %119 = arith.addf %118, %117 : vector<2x128xf32>
    %120 = arith.divf %118, %119 : vector<2x128xf32>
    %121 = arith.mulf %112, %93 : vector<2x128xf32>
    %122 = arith.mulf %106, %114 : vector<2x128xf32>
    %123 = arith.addf %121, %122 : vector<2x128xf32>
    %124 = math.tanh %123 : vector<2x128xf32>
    %125 = arith.mulf %120, %124 : vector<2x128xf32>
    %c4_i32 = arith.constant 4 : i32
    %126 = arith.index_cast %c4_i32 : i32 to index
    %c0_30 = arith.constant 0 : index
    %c0_31 = arith.constant 0 : index
    %127 = vector.load %arg1[%126, %c0_30, %c0_31] : memref<8x2x512xf32, #tpu.memory_space<vmem>>, vector<1x2x512xf32>
    %128 = vector.shape_cast %127 : vector<1x2x512xf32> to vector<2x512xf32>
    %cst_32 = arith.constant dense<0.000000e+00> : vector<2x512xf32>
    %129 = tpu.matmul %125, %3, %cst_32 {dimension_numbers = #tpu.dot_dimension_numbers<[1], [0], [0], [1], [0, 0, 1, 1], [], []>} : vector<2x128xf32>, vector<128x512xf32>, vector<2x512xf32> -> vector<2x512xf32>
    %130 = arith.addf %128, %129 : vector<2x512xf32>
    %131 = vector.extract_strided_slice %130 {offsets = [0, 0], sizes = [2, 128], strides = [1, 1]} : vector<2x512xf32> to vector<2x128xf32>
    %132 = arith.negf %131 : vector<2x128xf32>
    %133 = math.exp %132 : vector<2x128xf32>
    %cst_33 = arith.constant 1.000000e+00 : f32
    %134 = vector.broadcast %cst_33 : f32 to vector<2x128xf32>
    %135 = arith.addf %134, %133 : vector<2x128xf32>
    %136 = arith.divf %134, %135 : vector<2x128xf32>
    %137 = vector.extract_strided_slice %130 {offsets = [0, 128], sizes = [2, 128], strides = [1, 1]} : vector<2x512xf32> to vector<2x128xf32>
    %138 = arith.negf %137 : vector<2x128xf32>
    %139 = math.exp %138 : vector<2x128xf32>
    %cst_34 = arith.constant 1.000000e+00 : f32
    %140 = vector.broadcast %cst_34 : f32 to vector<2x128xf32>
    %141 = arith.addf %140, %139 : vector<2x128xf32>
    %142 = arith.divf %140, %141 : vector<2x128xf32>
    %143 = vector.extract_strided_slice %130 {offsets = [0, 256], sizes = [2, 128], strides = [1, 1]} : vector<2x512xf32> to vector<2x128xf32>
    %144 = math.tanh %143 : vector<2x128xf32>
    %145 = vector.extract_strided_slice %130 {offsets = [0, 384], sizes = [2, 128], strides = [1, 1]} : vector<2x512xf32> to vector<2x128xf32>
    %146 = arith.negf %145 : vector<2x128xf32>
    %147 = math.exp %146 : vector<2x128xf32>
    %cst_35 = arith.constant 1.000000e+00 : f32
    %148 = vector.broadcast %cst_35 : f32 to vector<2x128xf32>
    %149 = arith.addf %148, %147 : vector<2x128xf32>
    %150 = arith.divf %148, %149 : vector<2x128xf32>
    %151 = arith.mulf %142, %123 : vector<2x128xf32>
    %152 = arith.mulf %136, %144 : vector<2x128xf32>
    %153 = arith.addf %151, %152 : vector<2x128xf32>
    %154 = math.tanh %153 : vector<2x128xf32>
    %155 = arith.mulf %150, %154 : vector<2x128xf32>
    %c5_i32 = arith.constant 5 : i32
    %156 = arith.index_cast %c5_i32 : i32 to index
    %c0_36 = arith.constant 0 : index
    %c0_37 = arith.constant 0 : index
    %157 = vector.load %arg1[%156, %c0_36, %c0_37] : memref<8x2x512xf32, #tpu.memory_space<vmem>>, vector<1x2x512xf32>
    %158 = vector.shape_cast %157 : vector<1x2x512xf32> to vector<2x512xf32>
    %cst_38 = arith.constant dense<0.000000e+00> : vector<2x512xf32>
    %159 = tpu.matmul %155, %3, %cst_38 {dimension_numbers = #tpu.dot_dimension_numbers<[1], [0], [0], [1], [0, 0, 1, 1], [], []>} : vector<2x128xf32>, vector<128x512xf32>, vector<2x512xf32> -> vector<2x512xf32>
    %160 = arith.addf %158, %159 : vector<2x512xf32>
    %161 = vector.extract_strided_slice %160 {offsets = [0, 0], sizes = [2, 128], strides = [1, 1]} : vector<2x512xf32> to vector<2x128xf32>
    %162 = arith.negf %161 : vector<2x128xf32>
    %163 = math.exp %162 : vector<2x128xf32>
    %cst_39 = arith.constant 1.000000e+00 : f32
    %164 = vector.broadcast %cst_39 : f32 to vector<2x128xf32>
    %165 = arith.addf %164, %163 : vector<2x128xf32>
    %166 = arith.divf %164, %165 : vector<2x128xf32>
    %167 = vector.extract_strided_slice %160 {offsets = [0, 128], sizes = [2, 128], strides = [1, 1]} : vector<2x512xf32> to vector<2x128xf32>
    %168 = arith.negf %167 : vector<2x128xf32>
    %169 = math.exp %168 : vector<2x128xf32>
    %cst_40 = arith.constant 1.000000e+00 : f32
    %170 = vector.broadcast %cst_40 : f32 to vector<2x128xf32>
    %171 = arith.addf %170, %169 : vector<2x128xf32>
    %172 = arith.divf %170, %171 : vector<2x128xf32>
    %173 = vector.extract_strided_slice %160 {offsets = [0, 256], sizes = [2, 128], strides = [1, 1]} : vector<2x512xf32> to vector<2x128xf32>
    %174 = math.tanh %173 : vector<2x128xf32>
    %175 = vector.extract_strided_slice %160 {offsets = [0, 384], sizes = [2, 128], strides = [1, 1]} : vector<2x512xf32> to vector<2x128xf32>
    %176 = arith.negf %175 : vector<2x128xf32>
    %177 = math.exp %176 : vector<2x128xf32>
    %cst_41 = arith.constant 1.000000e+00 : f32
    %178 = vector.broadcast %cst_41 : f32 to vector<2x128xf32>
    %179 = arith.addf %178, %177 : vector<2x128xf32>
    %180 = arith.divf %178, %179 : vector<2x128xf32>
    %181 = arith.mulf %172, %153 : vector<2x128xf32>
    %182 = arith.mulf %166, %174 : vector<2x128xf32>
    %183 = arith.addf %181, %182 : vector<2x128xf32>
    %184 = math.tanh %183 : vector<2x128xf32>
    %185 = arith.mulf %180, %184 : vector<2x128xf32>
    %c6_i32 = arith.constant 6 : i32
    %186 = arith.index_cast %c6_i32 : i32 to index
    %c0_42 = arith.constant 0 : index
    %c0_43 = arith.constant 0 : index
    %187 = vector.load %arg1[%186, %c0_42, %c0_43] : memref<8x2x512xf32, #tpu.memory_space<vmem>>, vector<1x2x512xf32>
    %188 = vector.shape_cast %187 : vector<1x2x512xf32> to vector<2x512xf32>
    %cst_44 = arith.constant dense<0.000000e+00> : vector<2x512xf32>
    %189 = tpu.matmul %185, %3, %cst_44 {dimension_numbers = #tpu.dot_dimension_numbers<[1], [0], [0], [1], [0, 0, 1, 1], [], []>} : vector<2x128xf32>, vector<128x512xf32>, vector<2x512xf32> -> vector<2x512xf32>
    %190 = arith.addf %188, %189 : vector<2x512xf32>
    %191 = vector.extract_strided_slice %190 {offsets = [0, 0], sizes = [2, 128], strides = [1, 1]} : vector<2x512xf32> to vector<2x128xf32>
    %192 = arith.negf %191 : vector<2x128xf32>
    %193 = math.exp %192 : vector<2x128xf32>
    %cst_45 = arith.constant 1.000000e+00 : f32
    %194 = vector.broadcast %cst_45 : f32 to vector<2x128xf32>
    %195 = arith.addf %194, %193 : vector<2x128xf32>
    %196 = arith.divf %194, %195 : vector<2x128xf32>
    %197 = vector.extract_strided_slice %190 {offsets = [0, 128], sizes = [2, 128], strides = [1, 1]} : vector<2x512xf32> to vector<2x128xf32>
    %198 = arith.negf %197 : vector<2x128xf32>
    %199 = math.exp %198 : vector<2x128xf32>
    %cst_46 = arith.constant 1.000000e+00 : f32
    %200 = vector.broadcast %cst_46 : f32 to vector<2x128xf32>
    %201 = arith.addf %200, %199 : vector<2x128xf32>
    %202 = arith.divf %200, %201 : vector<2x128xf32>
    %203 = vector.extract_strided_slice %190 {offsets = [0, 256], sizes = [2, 128], strides = [1, 1]} : vector<2x512xf32> to vector<2x128xf32>
    %204 = math.tanh %203 : vector<2x128xf32>
    %205 = vector.extract_strided_slice %190 {offsets = [0, 384], sizes = [2, 128], strides = [1, 1]} : vector<2x512xf32> to vector<2x128xf32>
    %206 = arith.negf %205 : vector<2x128xf32>
    %207 = math.exp %206 : vector<2x128xf32>
    %cst_47 = arith.constant 1.000000e+00 : f32
    %208 = vector.broadcast %cst_47 : f32 to vector<2x128xf32>
    %209 = arith.addf %208, %207 : vector<2x128xf32>
    %210 = arith.divf %208, %209 : vector<2x128xf32>
    %211 = arith.mulf %202, %183 : vector<2x128xf32>
    %212 = arith.mulf %196, %204 : vector<2x128xf32>
    %213 = arith.addf %211, %212 : vector<2x128xf32>
    %214 = math.tanh %213 : vector<2x128xf32>
    %215 = arith.mulf %210, %214 : vector<2x128xf32>
    %c7_i32 = arith.constant 7 : i32
    %216 = arith.index_cast %c7_i32 : i32 to index
    %c0_48 = arith.constant 0 : index
    %c0_49 = arith.constant 0 : index
    %217 = vector.load %arg1[%216, %c0_48, %c0_49] : memref<8x2x512xf32, #tpu.memory_space<vmem>>, vector<1x2x512xf32>
    %218 = vector.shape_cast %217 : vector<1x2x512xf32> to vector<2x512xf32>
    %cst_50 = arith.constant dense<0.000000e+00> : vector<2x512xf32>
    %219 = tpu.matmul %215, %3, %cst_50 {dimension_numbers = #tpu.dot_dimension_numbers<[1], [0], [0], [1], [0, 0, 1, 1], [], []>} : vector<2x128xf32>, vector<128x512xf32>, vector<2x512xf32> -> vector<2x512xf32>
    %220 = arith.addf %218, %219 : vector<2x512xf32>
    %221 = vector.extract_strided_slice %220 {offsets = [0, 0], sizes = [2, 128], strides = [1, 1]} : vector<2x512xf32> to vector<2x128xf32>
    %222 = arith.negf %221 : vector<2x128xf32>
    %223 = math.exp %222 : vector<2x128xf32>
    %cst_51 = arith.constant 1.000000e+00 : f32
    %224 = vector.broadcast %cst_51 : f32 to vector<2x128xf32>
    %225 = arith.addf %224, %223 : vector<2x128xf32>
    %226 = arith.divf %224, %225 : vector<2x128xf32>
    %227 = vector.extract_strided_slice %220 {offsets = [0, 128], sizes = [2, 128], strides = [1, 1]} : vector<2x512xf32> to vector<2x128xf32>
    %228 = arith.negf %227 : vector<2x128xf32>
    %229 = math.exp %228 : vector<2x128xf32>
    %cst_52 = arith.constant 1.000000e+00 : f32
    %230 = vector.broadcast %cst_52 : f32 to vector<2x128xf32>
    %231 = arith.addf %230, %229 : vector<2x128xf32>
    %232 = arith.divf %230, %231 : vector<2x128xf32>
    %233 = vector.extract_strided_slice %220 {offsets = [0, 256], sizes = [2, 128], strides = [1, 1]} : vector<2x512xf32> to vector<2x128xf32>
    %234 = math.tanh %233 : vector<2x128xf32>
    %235 = vector.extract_strided_slice %220 {offsets = [0, 384], sizes = [2, 128], strides = [1, 1]} : vector<2x512xf32> to vector<2x128xf32>
    %236 = arith.negf %235 : vector<2x128xf32>
    %237 = math.exp %236 : vector<2x128xf32>
    %cst_53 = arith.constant 1.000000e+00 : f32
    %238 = vector.broadcast %cst_53 : f32 to vector<2x128xf32>
    %239 = arith.addf %238, %237 : vector<2x128xf32>
    %240 = arith.divf %238, %239 : vector<2x128xf32>
    %241 = arith.mulf %232, %213 : vector<2x128xf32>
    %242 = arith.mulf %226, %234 : vector<2x128xf32>
    %243 = arith.addf %241, %242 : vector<2x128xf32>
    %244 = math.tanh %243 : vector<2x128xf32>
    %245 = arith.mulf %240, %244 : vector<2x128xf32>
    %c8_i32 = arith.constant 8 : i32
    %c0_54 = arith.constant 0 : index
    %c0_55 = arith.constant 0 : index
    %246 = vector.load %arg4[%c0_54, %c0_55] : memref<2x128xf32, #tpu.memory_space<vmem>>, vector<2x128xf32>
    tpu.vector_store %arg4[%c0_54, %c0_55], %245 {strides = array<i32>} : memref<2x128xf32, #tpu.memory_space<vmem>>, vector<2x128xf32>,
    %c0_56 = arith.constant 0 : index
    %c0_57 = arith.constant 0 : index
    %247 = vector.load %arg5[%c0_56, %c0_57] : memref<2x128xf32, #tpu.memory_space<vmem>>, vector<2x128xf32>
    tpu.vector_store %arg5[%c0_56, %c0_57], %243 {strides = array<i32>} : memref<2x128xf32, #tpu.memory_space<vmem>>, vector<2x128xf32>,
    %c0_i32_58 = arith.constant 0 : i32
    %248 = arith.cmpi eq, %arg0, %c0_i32_58 : i32
    %249 = arith.extui %248 : i1 to i32
    %c0_i32_59 = arith.constant 0 : i32
    %250 = arith.cmpi ne, %249, %c0_i32_59 : i32
    scf.if %250 {
      %c0_60 = arith.constant 0 : index
      %c0_61 = arith.constant 0 : index
      %251 = vector.load %arg3[%c0_60, %c0_61] : memref<2x128xf32, #tpu.memory_space<vmem>>, vector<2x128xf32>
      tpu.vector_store %arg3[%c0_60, %c0_61], %245 {strides = array<i32>} : memref<2x128xf32, #tpu.memory_space<vmem>>, vector<2x128xf32>,
    } else {
    }
    return
  }
  func.func @transform_0(%arg0: i32) -> (i32, i32, i32) {
    %c0_i32 = arith.constant 0 : i32
    %c0_i32_0 = arith.constant 0 : i32
    %c0_i32_1 = arith.constant 0 : i32
    return %arg0, %c0_i32, %c0_i32_0 : i32, i32, i32
  }
  func.func @transform_1(%arg0: i32) -> (i32, i32) {
    %c0_i32 = arith.constant 0 : i32
    %c0_i32_0 = arith.constant 0 : i32
    %c0_i32_1 = arith.constant 0 : i32
    return %c0_i32, %c0_i32_0 : i32, i32
  }
  func.func @transform_2(%arg0: i32) -> (i32, i32) {
    %c0_i32 = arith.constant 0 : i32
    %c0_i32_0 = arith.constant 0 : i32
    %c0_i32_1 = arith.constant 0 : i32
    return %c0_i32, %c0_i32_0 : i32, i32
  }
}

</mosaic_0001>

<llo_original>
// kernel: tpu_custom_call.1
$region0: #{tpu_custom_call.1}
  #allocation0 [shape = 'u32[]', space=smem, size = 0x4, offset = 0x4, fixed_abs, tag = 'smem constant byte address 0x4 - core index']
  #allocation1 [shape = 'u32[144,128]{1,0:T(1,128)}', space=vmem, size = 0x12000, scoped, tag = 'internal scratch']
  #allocation2 [shape = 'f32[2,128]{1,0:T(2,128)}', space=vmem, size = 0x400, scoped, tag = 'scratch operand']
  #allocation3 [shape = 'f32[2,128]{1,0:T(2,128)}', space=vmem, size = 0x400, scoped, tag = 'scratch operand']
  %s0 = inlined_call_operand.hbm [shape: f32[8,2,512], index: 0, kind: input, shape index: {}]
  %s1 = inlined_call_operand.hbm [shape: f32[128,512], index: 1, kind: input, shape index: {}]
  %s2 = inlined_call_operand.hbm [shape: f32[2,128], index: 2, kind: output, shape index: {}]
  %s3 = sld [smem:[#allocation0]]
  $region34: #{tpu_custom_call.1} parent=0
    _
  %s5 = ssub.s32 1, %s3
  %s6 = scalar_select 0, %s5, %s3
  $region1: #{tpu_custom_call.1} parent=0
    #allocation4 [shape = 'u8[32768]{0}', space=vmem, size = 0x8000, scoped, tag = 'input window, operand 0, single buffered']
    #allocation5 [shape = 's32[1]{0}', space=sflag, size = 0x4, scoped, tag = 'scoped memory for tpu_custom_call.1']
    #allocation6 [shape = 's32[1]{0}', space=sflag, size = 0x4, scoped, tag = 'scoped memory for tpu_custom_call.1']
    #allocation7 [shape = 'u8[262144]{0}', space=vmem, size = 0x40000, scoped, tag = 'input window, operand 1, single buffered']
    #allocation8 [shape = 's32[1]{0}', space=sflag, size = 0x4, scoped, tag = 'scoped memory for tpu_custom_call.1']
    #allocation9 [shape = 'u8[1024]{0}', space=vmem, size = 0x400, scoped, tag = 'output window, operand 0, single buffered']
    %7 = vsyncpa [#allocation5], 0
    %8 = vsyncpa [#allocation8], 0
    %9 = vsyncpa [#allocation6], 0
    // Predicated region
    $region2: #{tpu_custom_call.1} parent=1 // pred_check
      _
    $region3: #{tpu_custom_call.1} parent=1 // pred_check_branch
      %11 = sbr.rel (0) target = $region5
    $region4: #{tpu_custom_call.1} parent=1 // pred_region
      %s13 = ssub.s32 1024, 1024
      %14 = vsyncadd [#allocation5], %s13
      %s15 = sshll.u32 [#allocation4], 4
      %s16 = int_to_ptr.vmem [resolvable:$true] %s15
      %21 = dma.hbm_to_vmem [thread:$0]  %s0, 1024, %s16, [#allocation5], 128, 128, 8
    $region5: #{tpu_custom_call.1} parent=1 // pred_fallthru
      _
    // Predicated region
    $region6: #{tpu_custom_call.1} parent=1 // pred_check
      _
    $region7: #{tpu_custom_call.1} parent=1 // pred_check_branch
      %23 = sbr.rel (0) target = $region9
    $region8: #{tpu_custom_call.1} parent=1 // pred_region
      %s25 = ssub.s32 8192, 8192
      %26 = vsyncadd [#allocation8], %s25
      %s27 = sshll.u32 [#allocation7], 4
      %s28 = int_to_ptr.vmem [resolvable:$true] %s27
      %33 = dma.hbm_to_vmem [thread:$0]  %s1, 8192, %s28, [#allocation8], 512, 512, 32
    $region9: #{tpu_custom_call.1} parent=1 // pred_fallthru
      _
    // Predicated region
    $region10: #{tpu_custom_call.1} parent=1 // pred_check
      _
    $region11: #{tpu_custom_call.1} parent=1 // pred_check_branch
      %35 = sbr.rel (0) target = $region13
    $region12: #{tpu_custom_call.1} parent=1 // pred_region
      %36 = dma.done [#allocation5], 1024
    $region13: #{tpu_custom_call.1} parent=1 // pred_fallthru
      _
    // Predicated region
    $region14: #{tpu_custom_call.1} parent=1 // pred_check
      _
    $region15: #{tpu_custom_call.1} parent=1 // pred_check_branch
      %38 = sbr.rel (0) target = $region17
    $region16: #{tpu_custom_call.1} parent=1 // pred_region
      %39 = dma.done [#allocation8], 8192
    $region17: #{tpu_custom_call.1} parent=1 // pred_fallthru
      _
    %p40 = scmp.eq.s32.totalorder 0, 0
    // Predicated region
    $region18: #{tpu_custom_call.1} parent=1 // pred_check
      %p41 = pneg %p40
    $region19: #{tpu_custom_call.1} parent=1 // pred_check_branch
      %43 = sbr.rel (%p41) target = $region21
    $region20: #{tpu_custom_call.1} parent=1 // pred_region
      %44 = vst [vmem:[#allocation2] sm:$0x3] 0.0
      %45 = vst [vmem:[#allocation3] sm:$0x3] 0.0
    $region21: #{tpu_custom_call.1} parent=1 // pred_fallthru
      _
    %v46 = vld [vmem:[#allocation7] sm:$0xff]
    %v47 = vld [vmem:[#allocation7 + $0x8] sm:$0xff]
    %v48 = vld [vmem:[#allocation7 + $0x10] sm:$0xff]
    %v49 = vld [vmem:[#allocation7 + $0x18] sm:$0xff]
    %v50 = vld [vmem:[#allocation7 + $0x20] sm:$0xff]
    %v51 = vld [vmem:[#allocation7 + $0x28] sm:$0xff]
    %v52 = vld [vmem:[#allocation7 + $0x30] sm:$0xff]
    %v53 = vld [vmem:[#allocation7 + $0x38] sm:$0xff]
    %v54 = vld [vmem:[#allocation7 + $0x40] sm:$0xff]
    %v55 = vld [vmem:[#allocation7 + $0x48] sm:$0xff]
    %v56 = vld [vmem:[#allocation7 + $0x50] sm:$0xff]
    %v57 = vld [vmem:[#allocation7 + $0x58] sm:$0xff]
    %v58 = vld [vmem:[#allocation7 + $0x60] sm:$0xff]
    %v59 = vld [vmem:[#allocation7 + $0x68] sm:$0xff]
    %v60 = vld [vmem:[#allocation7 + $0x70] sm:$0xff]
    %v61 = vld [vmem:[#allocation7 + $0x78] sm:$0xff]
    %v62 = vld [vmem:[#allocation7 + $0x80] sm:$0xff]
    %v63 = vld [vmem:[#allocation7 + $0x88] sm:$0xff]
    %v64 = vld [vmem:[#allocation7 + $0x90] sm:$0xff]
    %v65 = vld [vmem:[#allocation7 + $0x98] sm:$0xff]
    %v66 = vld [vmem:[#allocation7 + $0xa0] sm:$0xff]
    %v67 = vld [vmem:[#allocation7 + $0xa8] sm:$0xff]
    %v68 = vld [vmem:[#allocation7 + $0xb0] sm:$0xff]
    %v69 = vld [vmem:[#allocation7 + $0xb8] sm:$0xff]
    %v70 = vld [vmem:[#allocation7 + $0xc0] sm:$0xff]
    %v71 = vld [vmem:[#allocation7 + $0xc8] sm:$0xff]
    %v72 = vld [vmem:[#allocation7 + $0xd0] sm:$0xff]
    %v73 = vld [vmem:[#allocation7 + $0xd8] sm:$0xff]
    %v74 = vld [vmem:[#allocation7 + $0xe0] sm:$0xff]
    %v75 = vld [vmem:[#allocation7 + $0xe8] sm:$0xff]
    %v76 = vld [vmem:[#allocation7 + $0xf0] sm:$0xff]
    %v77 = vld [vmem:[#allocation7 + $0xf8] sm:$0xff]
    %v78 = vld [vmem:[#allocation7 + $0x100] sm:$0xff]
    %v79 = vld [vmem:[#allocation7 + $0x108] sm:$0xff]
    %v80 = vld [vmem:[#allocation7 + $0x110] sm:$0xff]
    %v81 = vld [vmem:[#allocation7 + $0x118] sm:$0xff]
    %v82 = vld [vmem:[#allocation7 + $0x120] sm:$0xff]
    %v83 = vld [vmem:[#allocation7 + $0x128] sm:$0xff]
    %v84 = vld [vmem:[#allocation7 + $0x130] sm:$0xff]
    %v85 = vld [vmem:[#allocation7 + $0x138] sm:$0xff]
    %v86 = vld [vmem:[#allocation7 + $0x140] sm:$0xff]
    %v87 = vld [vmem:[#allocation7 + $0x148] sm:$0xff]
    %v88 = vld [vmem:[#allocation7 + $0x150] sm:$0xff]
    %v89 = vld [vmem:[#allocation7 + $0x158] sm:$0xff]
    %v90 = vld [vmem:[#allocation7 + $0x160] sm:$0xff]
    %v91 = vld [vmem:[#allocation7 + $0x168] sm:$0xff]
    %v92 = vld [vmem:[#allocation7 + $0x170] sm:$0xff]
    %v93 = vld [vmem:[#allocation7 + $0x178] sm:$0xff]
    %v94 = vld [vmem:[#allocation7 + $0x180] sm:$0xff]
    %v95 = vld [vmem:[#allocation7 + $0x188] sm:$0xff]
    %v96 = vld [vmem:[#allocation7 + $0x190] sm:$0xff]
    %v97 = vld [vmem:[#allocation7 + $0x198] sm:$0xff]
    %v98 = vld [vmem:[#allocation7 + $0x1a0] sm:$0xff]
    %v99 = vld [vmem:[#allocation7 + $0x1a8] sm:$0xff]
    %v100 = vld [vmem:[#allocation7 + $0x1b0] sm:$0xff]
    %v101 = vld [vmem:[#allocation7 + $0x1b8] sm:$0xff]
    %v102 = vld [vmem:[#allocation7 + $0x1c0] sm:$0xff]
    %v103 = vld [vmem:[#allocation7 + $0x1c8] sm:$0xff]
    %v104 = vld [vmem:[#allocation7 + $0x1d0] sm:$0xff]
    %v105 = vld [vmem:[#allocation7 + $0x1d8] sm:$0xff]
    %v106 = vld [vmem:[#allocation7 + $0x1e0] sm:$0xff]
    %v107 = vld [vmem:[#allocation7 + $0x1e8] sm:$0xff]
    %v108 = vld [vmem:[#allocation7 + $0x1f0] sm:$0xff]
    %v109 = vld [vmem:[#allocation7 + $0x1f8] sm:$0xff]
    %v110 = vld [vmem:[#allocation2] sm:$0x3]
    %v111 = vld [vmem:[#allocation3] sm:$0x3]
    %v112 = vld [vmem:[#allocation4] sm:$0xff]
    %113 = vmatprep.subr.mxu0 %v107
    %114 = vmatpush1.msra.mxu0 %v106
    %115 = vmatprep.subr.mxu0 %v103
    %116 = vmatpush1.msra.mxu0 %v102
    %117 = vmatprep.subr.mxu0 %v99
    %118 = vmatpush1.msra.mxu0 %v98
    %119 = vmatprep.subr.mxu0 %v95
    %120 = vmatpush1.msra.mxu0 %v94
    %121 = vmatprep.subr.mxu0 %v91
    %122 = vmatpush1.msra.mxu0 %v90
    %123 = vmatprep.subr.mxu0 %v87
    %124 = vmatpush1.msra.mxu0 %v86
    %125 = vmatprep.subr.mxu0 %v83
    %126 = vmatpush1.msra.mxu0 %v82
    %127 = vmatprep.subr.mxu0 %v79
    %128 = vmatpush1.msra.mxu0 %v78
    %129 = vmatprep.subr.mxu0 %v75
    %130 = vmatpush1.msra.mxu0 %v74
    %131 = vmatprep.subr.mxu0 %v71
    %132 = vmatpush1.msra.mxu0 %v70
    %133 = vmatprep.subr.mxu0 %v67
    %134 = vmatpush1.msra.mxu0 %v66
    %135 = vmatprep.subr.mxu0 %v63
    %136 = vmatpush1.msra.mxu0 %v62
    %137 = vmatprep.subr.mxu0 %v59
    %138 = vmatpush1.msra.mxu0 %v58
    %139 = vmatprep.subr.mxu0 %v55
    %140 = vmatpush1.msra.mxu0 %v54
    %141 = vmatprep.subr.mxu0 %v51
    %142 = vmatpush1.msra.mxu0 %v50
    %143 = vmatprep.subr.mxu0 %v47
    %144 = vmatpush1.msra.mxu0 %v46
    %145 = vmatprep.subr.mxu0 0.0
    %146 = vmatpush2.msra.mxu0 0.0
    %147 = vmatprep.subr.mxu0 0.0
    %148 = vmatpush2.msra.mxu0 0.0
    %149 = vmatprep.subr.mxu0 0.0
    %150 = vmatpush2.msra.mxu0 0.0
    %151 = vmatprep.subr.mxu0 0.0
    %152 = vmatpush2.msra.mxu0 0.0
    %153 = vmatprep.subr.mxu0 0.0
    %154 = vmatpush2.msra.mxu0 0.0
    %155 = vmatprep.subr.mxu0 0.0
    %156 = vmatpush2.msra.mxu0 0.0
    %157 = vmatprep.subr.mxu0 0.0
    %158 = vmatpush2.msra.mxu0 0.0
    %159 = vmatprep.subr.mxu0 0.0
    %160 = vmatpush2.msra.mxu0 0.0
    %161 = vmatprep.subr.mxu0 0.0
    %162 = vmatpush2.msra.mxu0 0.0
    %163 = vmatprep.subr.mxu0 0.0
    %164 = vmatpush2.msra.mxu0 0.0
    %165 = vmatprep.subr.mxu0 0.0
    %166 = vmatpush2.msra.mxu0 0.0
    %167 = vmatprep.subr.mxu0 0.0
    %168 = vmatpush2.msra.mxu0 0.0
    %169 = vmatprep.subr.mxu0 0.0
    %170 = vmatpush2.msra.mxu0 0.0
    %171 = vmatprep.subr.mxu0 0.0
    %172 = vmatpush2.msra.mxu0 0.0
    %173 = vmatprep.subr.mxu0 0.0
    %174 = vmatpush2.msra.mxu0 0.0
    %175 = vmatprep.subr.mxu0 0.0
    %176 = vmatpush2.msra.mxu0 0.0
    %177 = vmatprep.mubr.f32.mxu0 0.0
    %178 = vmatmul.mubr.f32.gmra.mxu0 %v110
    %v179 = vpop.f32.mrf.mxu0
    %v180 = vadd.f32 0.0, %v179
    %v181 = vpop.f32.mrf.mxu0
    %v182 = vadd.f32 0.0, %v181
    %183 = vdwg.mxu0
    %184 = vmatprep.subr.mxu0 %v109
    %185 = vmatpush1.msra.mxu0 %v108
    %186 = vmatprep.subr.mxu0 %v105
    %187 = vmatpush1.msra.mxu0 %v104
    %188 = vmatprep.subr.mxu0 %v101
    %189 = vmatpush1.msra.mxu0 %v100
    %190 = vmatprep.subr.mxu0 %v97
    %191 = vmatpush1.msra.mxu0 %v96
    %192 = vmatprep.subr.mxu0 %v93
    %193 = vmatpush1.msra.mxu0 %v92
    %194 = vmatprep.subr.mxu0 %v89
    %195 = vmatpush1.msra.mxu0 %v88
    %196 = vmatprep.subr.mxu0 %v85
    %197 = vmatpush1.msra.mxu0 %v84
    %198 = vmatprep.subr.mxu0 %v81
    %199 = vmatpush1.msra.mxu0 %v80
    %200 = vmatprep.subr.mxu0 %v77
    %201 = vmatpush1.msra.mxu0 %v76
    %202 = vmatprep.subr.mxu0 %v73
    %203 = vmatpush1.msra.mxu0 %v72
    %204 = vmatprep.subr.mxu0 %v69
    %205 = vmatpush1.msra.mxu0 %v68
    %206 = vmatprep.subr.mxu0 %v65
    %207 = vmatpush1.msra.mxu0 %v64
    %208 = vmatprep.subr.mxu0 %v61
    %209 = vmatpush1.msra.mxu0 %v60
    %210 = vmatprep.subr.mxu0 %v57
    %211 = vmatpush1.msra.mxu0 %v56
    %212 = vmatprep.subr.mxu0 %v53
    %213 = vmatpush1.msra.mxu0 %v52
    %214 = vmatprep.subr.mxu0 %v49
    %215 = vmatpush1.msra.mxu0 %v48
    %216 = vmatprep.subr.mxu0 0.0
    %217 = vmatpush2.msra.mxu0 0.0
    %218 = vmatprep.subr.mxu0 0.0
    %219 = vmatpush2.msra.mxu0 0.0
    %220 = vmatprep.subr.mxu0 0.0
    %221 = vmatpush2.msra.mxu0 0.0
    %222 = vmatprep.subr.mxu0 0.0
    %223 = vmatpush2.msra.mxu0 0.0
    %224 = vmatprep.subr.mxu0 0.0
    %225 = vmatpush2.msra.mxu0 0.0
    %226 = vmatprep.subr.mxu0 0.0
    %227 = vmatpush2.msra.mxu0 0.0
    %228 = vmatprep.subr.mxu0 0.0
    %229 = vmatpush2.msra.mxu0 0.0
    %230 = vmatprep.subr.mxu0 0.0
    %231 = vmatpush2.msra.mxu0 0.0
    %232 = vmatprep.subr.mxu0 0.0
    %233 = vmatpush2.msra.mxu0 0.0
    %234 = vmatprep.subr.mxu0 0.0
    %235 = vmatpush2.msra.mxu0 0.0
    %236 = vmatprep.subr.mxu0 0.0
    %237 = vmatpush2.msra.mxu0 0.0
    %238 = vmatprep.subr.mxu0 0.0
    %239 = vmatpush2.msra.mxu0 0.0
    %240 = vmatprep.subr.mxu0 0.0
    %241 = vmatpush2.msra.mxu0 0.0
    %242 = vmatprep.subr.mxu0 0.0
    %243 = vmatpush2.msra.mxu0 0.0
    %244 = vmatprep.subr.mxu0 0.0
    %245 = vmatpush2.msra.mxu0 0.0
    %246 = vmatprep.subr.mxu0 0.0
    %247 = vmatpush2.msra.mxu0 0.0
    %248 = vmatprep.mubr.f32.mxu0 0.0
    %249 = vmatmul.mubr.f32.gmra.mxu0 %v110
    %v250 = vpop.f32.mrf.mxu0
    %v251 = vadd.f32 0.0, %v250
    %v252 = vpop.f32.mrf.mxu0
    %v253 = vadd.f32 0.0, %v252
    %254 = vdwg.mxu0
    %v259 = vcombine.low %v180, %v182
    %v260 = vcombine.low %v251, %v253
    %v262 = vunpack.c.l.s4 1983009808
    %v263 = vunpack.c.0.s8 %v262
    %v264 = vlaneseq
    %v265 = vshrl.u32 %v264, 7
    %v266 = vsub.s32 %v263, %v265
    %v267 = vrot.slane %v259, %v266
    %v269 = vunpack.c.l.s4 1983009808
    %v270 = vunpack.c.0.s8 %v269
    %v271 = vlaneseq
    %v272 = vshrl.u32 %v271, 7
    %v273 = vsub.s32 %v270, %v272
    %v274 = vrot.slane %v260, %v273
    %v275 = vcombine.low %v267, %v274
    %v277 = vadd.f32 %v112, %v275
    %v278 = vxor.u32 %v277, 2147483648
    %v279 = vmul.f32 %v278, 1.442695
    %v280 = vpow.pop %v279
    %v281 = vadd.f32 %v280, 1.0
    %v282 = vrcp.pop %v281
    %v283 = vmul.f32 1.0, %v282
    %v285 = vrot.slane %v277, 2
    %v287 = vxor.u32 %v285, 2147483648
    %v288 = vmul.f32 %v287, 1.442695
    %v289 = vpow.pop %v288
    %v290 = vadd.f32 %v289, 1.0
    %v291 = vrcp.pop %v290
    %v292 = vmul.f32 1.0, %v291
    %v293 = vrot.slane %v277, 4
    %v295 = vtanh.pop %v293
    %v296 = vrot.slane %v277, 6
    %v298 = vxor.u32 %v296, 2147483648
    %v299 = vmul.f32 %v298, 1.442695
    %v300 = vpow.pop %v299
    %v301 = vadd.f32 %v300, 1.0
    %v302 = vrcp.pop %v301
    %v303 = vmul.f32 1.0, %v302
    %v304 = vmul.f32 %v292, %v111
    %v305 = vmul.f32 %v283, %v295
    %v306 = vadd.f32 %v304, %v305
    %v307 = vtanh.pop %v306
    %v308 = vmul.f32 %v303, %v307
    %s309 = scalar_lea.vmem [#allocation4], 8
    %v310 = vld [vmem:[%s309] sm:$0xff]
    %311 = vmatprep.subr.mxu0 %v107
    %312 = vmatpush1.msra.mxu0 %v106
    %313 = vmatprep.subr.mxu0 %v103
    %314 = vmatpush1.msra.mxu0 %v102
    %315 = vmatprep.subr.mxu0 %v99
    %316 = vmatpush1.msra.mxu0 %v98
    %317 = vmatprep.subr.mxu0 %v95
    %318 = vmatpush1.msra.mxu0 %v94
    %319 = vmatprep.subr.mxu0 %v91
    %320 = vmatpush1.msra.mxu0 %v90
    %321 = vmatprep.subr.mxu0 %v87
    %322 = vmatpush1.msra.mxu0 %v86
    %323 = vmatprep.subr.mxu0 %v83
    %324 = vmatpush1.msra.mxu0 %v82
    %325 = vmatprep.subr.mxu0 %v79
    %326 = vmatpush1.msra.mxu0 %v78
    %327 = vmatprep.subr.mxu0 %v75
    %328 = vmatpush1.msra.mxu0 %v74
    %329 = vmatprep.subr.mxu0 %v71
    %330 = vmatpush1.msra.mxu0 %v70
    %331 = vmatprep.subr.mxu0 %v67
    %332 = vmatpush1.msra.mxu0 %v66
    %333 = vmatprep.subr.mxu0 %v63
    %334 = vmatpush1.msra.mxu0 %v62
    %335 = vmatprep.subr.mxu0 %v59
    %336 = vmatpush1.msra.mxu0 %v58
    %337 = vmatprep.subr.mxu0 %v55
    %338 = vmatpush1.msra.mxu0 %v54
    %339 = vmatprep.subr.mxu0 %v51
    %340 = vmatpush1.msra.mxu0 %v50
    %341 = vmatprep.subr.mxu0 %v47
    %342 = vmatpush1.msra.mxu0 %v46
    %343 = vmatprep.subr.mxu0 0.0
    %344 = vmatpush2.msra.mxu0 0.0
    %345 = vmatprep.subr.mxu0 0.0
    %346 = vmatpush2.msra.mxu0 0.0
    %347 = vmatprep.subr.mxu0 0.0
    %348 = vmatpush2.msra.mxu0 0.0
    %349 = vmatprep.subr.mxu0 0.0
    %350 = vmatpush2.msra.mxu0 0.0
    %351 = vmatprep.subr.mxu0 0.0
    %352 = vmatpush2.msra.mxu0 0.0
    %353 = vmatprep.subr.mxu0 0.0
    %354 = vmatpush2.msra.mxu0 0.0
    %355 = vmatprep.subr.mxu0 0.0
    %356 = vmatpush2.msra.mxu0 0.0
    %357 = vmatprep.subr.mxu0 0.0
    %358 = vmatpush2.msra.mxu0 0.0
    %359 = vmatprep.subr.mxu0 0.0
    %360 = vmatpush2.msra.mxu0 0.0
    %361 = vmatprep.subr.mxu0 0.0
    %362 = vmatpush2.msra.mxu0 0.0
    %363 = vmatprep.subr.mxu0 0.0
    %364 = vmatpush2.msra.mxu0 0.0
    %365 = vmatprep.subr.mxu0 0.0
    %366 = vmatpush2.msra.mxu0 0.0
    %367 = vmatprep.subr.mxu0 0.0
    %368 = vmatpush2.msra.mxu0 0.0
    %369 = vmatprep.subr.mxu0 0.0
    %370 = vmatpush2.msra.mxu0 0.0
    %371 = vmatprep.subr.mxu0 0.0
    %372 = vmatpush2.msra.mxu0 0.0
    %373 = vmatprep.subr.mxu0 0.0
    %374 = vmatpush2.msra.mxu0 0.0
    %375 = vmatprep.mubr.f32.mxu0 0.0
    %376 = vmatmul.mubr.f32.gmra.mxu0 %v308
    %v377 = vpop.f32.mrf.mxu0
    %v378 = vadd.f32 0.0, %v377
    %v379 = vpop.f32.mrf.mxu0
    %v380 = vadd.f32 0.0, %v379
    %381 = vdwg.mxu0
    %382 = vmatprep.subr.mxu0 %v109
    %383 = vmatpush1.msra.mxu0 %v108
    %384 = vmatprep.subr.mxu0 %v105
    %385 = vmatpush1.msra.mxu0 %v104
    %386 = vmatprep.subr.mxu0 %v101
    %387 = vmatpush1.msra.mxu0 %v100
    %388 = vmatprep.subr.mxu0 %v97
    %389 = vmatpush1.msra.mxu0 %v96
    %390 = vmatprep.subr.mxu0 %v93
    %391 = vmatpush1.msra.mxu0 %v92
    %392 = vmatprep.subr.mxu0 %v89
    %393 = vmatpush1.msra.mxu0 %v88
    %394 = vmatprep.subr.mxu0 %v85
    %395 = vmatpush1.msra.mxu0 %v84
    %396 = vmatprep.subr.mxu0 %v81
    %397 = vmatpush1.msra.mxu0 %v80
    %398 = vmatprep.subr.mxu0 %v77
    %399 = vmatpush1.msra.mxu0 %v76
    %400 = vmatprep.subr.mxu0 %v73
    %401 = vmatpush1.msra.mxu0 %v72
    %402 = vmatprep.subr.mxu0 %v69
    %403 = vmatpush1.msra.mxu0 %v68
    %404 = vmatprep.subr.mxu0 %v65
    %405 = vmatpush1.msra.mxu0 %v64
    %406 = vmatprep.subr.mxu0 %v61
    %407 = vmatpush1.msra.mxu0 %v60
    %408 = vmatprep.subr.mxu0 %v57
    %409 = vmatpush1.msra.mxu0 %v56
    %410 = vmatprep.subr.mxu0 %v53
    %411 = vmatpush1.msra.mxu0 %v52
    %412 = vmatprep.subr.mxu0 %v49
    %413 = vmatpush1.msra.mxu0 %v48
    %414 = vmatprep.subr.mxu0 0.0
    %415 = vmatpush2.msra.mxu0 0.0
    %416 = vmatprep.subr.mxu0 0.0
    %417 = vmatpush2.msra.mxu0 0.0
    %418 = vmatprep.subr.mxu0 0.0
    %419 = vmatpush2.msra.mxu0 0.0
    %420 = vmatprep.subr.mxu0 0.0
    %421 = vmatpush2.msra.mxu0 0.0
    %422 = vmatprep.subr.mxu0 0.0
    %423 = vmatpush2.msra.mxu0 0.0
    %424 = vmatprep.subr.mxu0 0.0
    %425 = vmatpush2.msra.mxu0 0.0
    %426 = vmatprep.subr.mxu0 0.0
    %427 = vmatpush2.msra.mxu0 0.0
    %428 = vmatprep.subr.mxu0 0.0
    %429 = vmatpush2.msra.mxu0 0.0
    %430 = vmatprep.subr.mxu0 0.0
    %431 = vmatpush2.msra.mxu0 0.0
    %432 = vmatprep.subr.mxu0 0.0
    %433 = vmatpush2.msra.mxu0 0.0
    %434 = vmatprep.subr.mxu0 0.0
    %435 = vmatpush2.msra.mxu0 0.0
    %436 = vmatprep.subr.mxu0 0.0
    %437 = vmatpush2.msra.mxu0 0.0
    %438 = vmatprep.subr.mxu0 0.0
    %439 = vmatpush2.msra.mxu0 0.0
    %440 = vmatprep.subr.mxu0 0.0
    %441 = vmatpush2.msra.mxu0 0.0
    %442 = vmatprep.subr.mxu0 0.0
    %443 = vmatpush2.msra.mxu0 0.0
    %444 = vmatprep.subr.mxu0 0.0
    %445 = vmatpush2.msra.mxu0 0.0
    %446 = vmatprep.mubr.f32.mxu0 0.0
    %447 = vmatmul.mubr.f32.gmra.mxu0 %v308
    %v448 = vpop.f32.mrf.mxu0
    %v449 = vadd.f32 0.0, %v448
    %v450 = vpop.f32.mrf.mxu0
    %v451 = vadd.f32 0.0, %v450
    %452 = vdwg.mxu0
    %v457 = vcombine.low %v378, %v380
    %v458 = vcombine.low %v449, %v451
    %v460 = vunpack.c.l.s4 1983009808
    %v461 = vunpack.c.0.s8 %v460
    %v462 = vlaneseq
    %v463 = vshrl.u32 %v462, 7
    %v464 = vsub.s32 %v461, %v463
    %v465 = vrot.slane %v457, %v464
    %v467 = vunpack.c.l.s4 1983009808
    %v468 = vunpack.c.0.s8 %v467
    %v469 = vlaneseq
    %v470 = vshrl.u32 %v469, 7
    %v471 = vsub.s32 %v468, %v470
    %v472 = vrot.slane %v458, %v471
    %v473 = vcombine.low %v465, %v472
    %v475 = vadd.f32 %v310, %v473
    %v476 = vxor.u32 %v475, 2147483648
    %v477 = vmul.f32 %v476, 1.442695
    %v478 = vpow.pop %v477
    %v479 = vadd.f32 %v478, 1.0
    %v480 = vrcp.pop %v479
    %v481 = vmul.f32 1.0, %v480
    %v483 = vrot.slane %v475, 2
    %v485 = vxor.u32 %v483, 2147483648
    %v486 = vmul.f32 %v485, 1.442695
    %v487 = vpow.pop %v486
    %v488 = vadd.f32 %v487, 1.0
    %v489 = vrcp.pop %v488
    %v490 = vmul.f32 1.0, %v489
    %v491 = vrot.slane %v475, 4
    %v493 = vtanh.pop %v491
    %v494 = vrot.slane %v475, 6
    %v496 = vxor.u32 %v494, 2147483648
    %v497 = vmul.f32 %v496, 1.442695
    %v498 = vpow.pop %v497
    %v499 = vadd.f32 %v498, 1.0
    %v500 = vrcp.pop %v499
    %v501 = vmul.f32 1.0, %v500
    %v502 = vmul.f32 %v490, %v306
    %v503 = vmul.f32 %v481, %v493
    %v504 = vadd.f32 %v502, %v503
    %v505 = vtanh.pop %v504
    %v506 = vmul.f32 %v501, %v505
    %s507 = scalar_lea.vmem [#allocation4], 16
    %v508 = vld [vmem:[%s507] sm:$0xff]
    %509 = vmatprep.subr.mxu0 %v107
    %510 = vmatpush1.msra.mxu0 %v106
    %511 = vmatprep.subr.mxu0 %v103
    %512 = vmatpush1.msra.mxu0 %v102
    %513 = vmatprep.subr.mxu0 %v99
    %514 = vmatpush1.msra.mxu0 %v98
    %515 = vmatprep.subr.mxu0 %v95
    %516 = vmatpush1.msra.mxu0 %v94
    %517 = vmatprep.subr.mxu0 %v91
    %518 = vmatpush1.msra.mxu0 %v90
    %519 = vmatprep.subr.mxu0 %v87
    %520 = vmatpush1.msra.mxu0 %v86
    %521 = vmatprep.subr.mxu0 %v83
    %522 = vmatpush1.msra.mxu0 %v82
    %523 = vmatprep.subr.mxu0 %v79
    %524 = vmatpush1.msra.mxu0 %v78
    %525 = vmatprep.subr.mxu0 %v75
    %526 = vmatpush1.msra.mxu0 %v74
    %527 = vmatprep.subr.mxu0 %v71
    %528 = vmatpush1.msra.mxu0 %v70
    %529 = vmatprep.subr.mxu0 %v67
    %530 = vmatpush1.msra.mxu0 %v66
    %531 = vmatprep.subr.mxu0 %v63
    %532 = vmatpush1.msra.mxu0 %v62
    %533 = vmatprep.subr.mxu0 %v59
    %534 = vmatpush1.msra.mxu0 %v58
    %535 = vmatprep.subr.mxu0 %v55
    %536 = vmatpush1.msra.mxu0 %v54
    %537 = vmatprep.subr.mxu0 %v51
    %538 = vmatpush1.msra.mxu0 %v50
    %539 = vmatprep.subr.mxu0 %v47
    %540 = vmatpush1.msra.mxu0 %v46
    %541 = vmatprep.subr.mxu0 0.0
    %542 = vmatpush2.msra.mxu0 0.0
    %543 = vmatprep.subr.mxu0 0.0
    %544 = vmatpush2.msra.mxu0 0.0
    %545 = vmatprep.subr.mxu0 0.0
    %546 = vmatpush2.msra.mxu0 0.0
    %547 = vmatprep.subr.mxu0 0.0
    %548 = vmatpush2.msra.mxu0 0.0
    %549 = vmatprep.subr.mxu0 0.0
    %550 = vmatpush2.msra.mxu0 0.0
    %551 = vmatprep.subr.mxu0 0.0
    %552 = vmatpush2.msra.mxu0 0.0
    %553 = vmatprep.subr.mxu0 0.0
    %554 = vmatpush2.msra.mxu0 0.0
    %555 = vmatprep.subr.mxu0 0.0
    %556 = vmatpush2.msra.mxu0 0.0
    %557 = vmatprep.subr.mxu0 0.0
    %558 = vmatpush2.msra.mxu0 0.0
    %559 = vmatprep.subr.mxu0 0.0
    %560 = vmatpush2.msra.mxu0 0.0
    %561 = vmatprep.subr.mxu0 0.0
    %562 = vmatpush2.msra.mxu0 0.0
    %563 = vmatprep.subr.mxu0 0.0
    %564 = vmatpush2.msra.mxu0 0.0
    %565 = vmatprep.subr.mxu0 0.0
    %566 = vmatpush2.msra.mxu0 0.0
    %567 = vmatprep.subr.mxu0 0.0
    %568 = vmatpush2.msra.mxu0 0.0
    %569 = vmatprep.subr.mxu0 0.0
    %570 = vmatpush2.msra.mxu0 0.0
    %571 = vmatprep.subr.mxu0 0.0
    %572 = vmatpush2.msra.mxu0 0.0
    %573 = vmatprep.mubr.f32.mxu0 0.0
    %574 = vmatmul.mubr.f32.gmra.mxu0 %v506
    %v575 = vpop.f32.mrf.mxu0
    %v576 = vadd.f32 0.0, %v575
    %v577 = vpop.f32.mrf.mxu0
    %v578 = vadd.f32 0.0, %v577
    %579 = vdwg.mxu0
    %580 = vmatprep.subr.mxu0 %v109
    %581 = vmatpush1.msra.mxu0 %v108
    %582 = vmatprep.subr.mxu0 %v105
    %583 = vmatpush1.msra.mxu0 %v104
    %584 = vmatprep.subr.mxu0 %v101
    %585 = vmatpush1.msra.mxu0 %v100
    %586 = vmatprep.subr.mxu0 %v97
    %587 = vmatpush1.msra.mxu0 %v96
    %588 = vmatprep.subr.mxu0 %v93
    %589 = vmatpush1.msra.mxu0 %v92
    %590 = vmatprep.subr.mxu0 %v89
    %591 = vmatpush1.msra.mxu0 %v88
    %592 = vmatprep.subr.mxu0 %v85
    %593 = vmatpush1.msra.mxu0 %v84
    %594 = vmatprep.subr.mxu0 %v81
    %595 = vmatpush1.msra.mxu0 %v80
    %596 = vmatprep.subr.mxu0 %v77
    %597 = vmatpush1.msra.mxu0 %v76
    %598 = vmatprep.subr.mxu0 %v73
    %599 = vmatpush1.msra.mxu0 %v72
    %600 = vmatprep.subr.mxu0 %v69
    %601 = vmatpush1.msra.mxu0 %v68
    %602 = vmatprep.subr.mxu0 %v65
    %603 = vmatpush1.msra.mxu0 %v64
    %604 = vmatprep.subr.mxu0 %v61
    %605 = vmatpush1.msra.mxu0 %v60
    %606 = vmatprep.subr.mxu0 %v57
    %607 = vmatpush1.msra.mxu0 %v56
    %608 = vmatprep.subr.mxu0 %v53
    %609 = vmatpush1.msra.mxu0 %v52
    %610 = vmatprep.subr.mxu0 %v49
    %611 = vmatpush1.msra.mxu0 %v48
    %612 = vmatprep.subr.mxu0 0.0
    %613 = vmatpush2.msra.mxu0 0.0
    %614 = vmatprep.subr.mxu0 0.0
    %615 = vmatpush2.msra.mxu0 0.0
    %616 = vmatprep.subr.mxu0 0.0
    %617 = vmatpush2.msra.mxu0 0.0
    %618 = vmatprep.subr.mxu0 0.0
    %619 = vmatpush2.msra.mxu0 0.0
    %620 = vmatprep.subr.mxu0 0.0
    %621 = vmatpush2.msra.mxu0 0.0
    %622 = vmatprep.subr.mxu0 0.0
    %623 = vmatpush2.msra.mxu0 0.0
    %624 = vmatprep.subr.mxu0 0.0
    %625 = vmatpush2.msra.mxu0 0.0
    %626 = vmatprep.subr.mxu0 0.0
    %627 = vmatpush2.msra.mxu0 0.0
    %628 = vmatprep.subr.mxu0 0.0
    %629 = vmatpush2.msra.mxu0 0.0
    %630 = vmatprep.subr.mxu0 0.0
    %631 = vmatpush2.msra.mxu0 0.0
    %632 = vmatprep.subr.mxu0 0.0
    %633 = vmatpush2.msra.mxu0 0.0
    %634 = vmatprep.subr.mxu0 0.0
    %635 = vmatpush2.msra.mxu0 0.0
    %636 = vmatprep.subr.mxu0 0.0
    %637 = vmatpush2.msra.mxu0 0.0
    %638 = vmatprep.subr.mxu0 0.0
    %639 = vmatpush2.msra.mxu0 0.0
    %640 = vmatprep.subr.mxu0 0.0
    %641 = vmatpush2.msra.mxu0 0.0
    %642 = vmatprep.subr.mxu0 0.0
    %643 = vmatpush2.msra.mxu0 0.0
    %644 = vmatprep.mubr.f32.mxu0 0.0
    %645 = vmatmul.mubr.f32.gmra.mxu0 %v506
    %v646 = vpop.f32.mrf.mxu0
    %v647 = vadd.f32 0.0, %v646
    %v648 = vpop.f32.mrf.mxu0
    %v649 = vadd.f32 0.0, %v648
    %650 = vdwg.mxu0
    %v655 = vcombine.low %v576, %v578
    %v656 = vcombine.low %v647, %v649
    %v658 = vunpack.c.l.s4 1983009808
    %v659 = vunpack.c.0.s8 %v658
    %v660 = vlaneseq
    %v661 = vshrl.u32 %v660, 7
    %v662 = vsub.s32 %v659, %v661
    %v663 = vrot.slane %v655, %v662
    %v665 = vunpack.c.l.s4 1983009808
    %v666 = vunpack.c.0.s8 %v665
    %v667 = vlaneseq
    %v668 = vshrl.u32 %v667, 7
    %v669 = vsub.s32 %v666, %v668
    %v670 = vrot.slane %v656, %v669
    %v671 = vcombine.low %v663, %v670
    %v673 = vadd.f32 %v508, %v671
    %v674 = vxor.u32 %v673, 2147483648
    %v675 = vmul.f32 %v674, 1.442695
    %v676 = vpow.pop %v675
    %v677 = vadd.f32 %v676, 1.0
    %v678 = vrcp.pop %v677
    %v679 = vmul.f32 1.0, %v678
    %v681 = vrot.slane %v673, 2
    %v683 = vxor.u32 %v681, 2147483648
    %v684 = vmul.f32 %v683, 1.442695
    %v685 = vpow.pop %v684
    %v686 = vadd.f32 %v685, 1.0
    %v687 = vrcp.pop %v686
    %v688 = vmul.f32 1.0, %v687
    %v689 = vrot.slane %v673, 4
    %v691 = vtanh.pop %v689
    %v692 = vrot.slane %v673, 6
    %v694 = vxor.u32 %v692, 2147483648
    %v695 = vmul.f32 %v694, 1.442695
    %v696 = vpow.pop %v695
    %v697 = vadd.f32 %v696, 1.0
    %v698 = vrcp.pop %v697
    %v699 = vmul.f32 1.0, %v698
    %v700 = vmul.f32 %v688, %v504
    %v701 = vmul.f32 %v679, %v691
    %v702 = vadd.f32 %v700, %v701
    %v703 = vtanh.pop %v702
    %v704 = vmul.f32 %v699, %v703
    %s705 = scalar_lea.vmem [#allocation4], 24
    %v706 = vld [vmem:[%s705] sm:$0xff]
    %707 = vmatprep.subr.mxu0 %v107
    %708 = vmatpush1.msra.mxu0 %v106
    %709 = vmatprep.subr.mxu0 %v103
    %710 = vmatpush1.msra.mxu0 %v102
    %711 = vmatprep.subr.mxu0 %v99
    %712 = vmatpush1.msra.mxu0 %v98
    %713 = vmatprep.subr.mxu0 %v95
    %714 = vmatpush1.msra.mxu0 %v94
    %715 = vmatprep.subr.mxu0 %v91
    %716 = vmatpush1.msra.mxu0 %v90
    %717 = vmatprep.subr.mxu0 %v87
    %718 = vmatpush1.msra.mxu0 %v86
    %719 = vmatprep.subr.mxu0 %v83
    %720 = vmatpush1.msra.mxu0 %v82
    %721 = vmatprep.subr.mxu0 %v79
    %722 = vmatpush1.msra.mxu0 %v78
    %723 = vmatprep.subr.mxu0 %v75
    %724 = vmatpush1.msra.mxu0 %v74
    %725 = vmatprep.subr.mxu0 %v71
    %726 = vmatpush1.msra.mxu0 %v70
    %727 = vmatprep.subr.mxu0 %v67
    %728 = vmatpush1.msra.mxu0 %v66
    %729 = vmatprep.subr.mxu0 %v63
    %730 = vmatpush1.msra.mxu0 %v62
    %731 = vmatprep.subr.mxu0 %v59
    %732 = vmatpush1.msra.mxu0 %v58
    %733 = vmatprep.subr.mxu0 %v55
    %734 = vmatpush1.msra.mxu0 %v54
    %735 = vmatprep.subr.mxu0 %v51
    %736 = vmatpush1.msra.mxu0 %v50
    %737 = vmatprep.subr.mxu0 %v47
    %738 = vmatpush1.msra.mxu0 %v46
    %739 = vmatprep.subr.mxu0 0.0
    %740 = vmatpush2.msra.mxu0 0.0
    %741 = vmatprep.subr.mxu0 0.0
    %742 = vmatpush2.msra.mxu0 0.0
    %743 = vmatprep.subr.mxu0 0.0
    %744 = vmatpush2.msra.mxu0 0.0
    %745 = vmatprep.subr.mxu0 0.0
    %746 = vmatpush2.msra.mxu0 0.0
    %747 = vmatprep.subr.mxu0 0.0
    %748 = vmatpush2.msra.mxu0 0.0
    %749 = vmatprep.subr.mxu0 0.0
    %750 = vmatpush2.msra.mxu0 0.0
    %751 = vmatprep.subr.mxu0 0.0
    %752 = vmatpush2.msra.mxu0 0.0
    %753 = vmatprep.subr.mxu0 0.0
    %754 = vmatpush2.msra.mxu0 0.0
    %755 = vmatprep.subr.mxu0 0.0
    %756 = vmatpush2.msra.mxu0 0.0
    %757 = vmatprep.subr.mxu0 0.0
    %758 = vmatpush2.msra.mxu0 0.0
    %759 = vmatprep.subr.mxu0 0.0
    %760 = vmatpush2.msra.mxu0 0.0
    %761 = vmatprep.subr.mxu0 0.0
    %762 = vmatpush2.msra.mxu0 0.0
    %763 = vmatprep.subr.mxu0 0.0
    %764 = vmatpush2.msra.mxu0 0.0
    %765 = vmatprep.subr.mxu0 0.0
    %766 = vmatpush2.msra.mxu0 0.0
    %767 = vmatprep.subr.mxu0 0.0
    %768 = vmatpush2.msra.mxu0 0.0
    %769 = vmatprep.subr.mxu0 0.0
    %770 = vmatpush2.msra.mxu0 0.0
    %771 = vmatprep.mubr.f32.mxu0 0.0
    %772 = vmatmul.mubr.f32.gmra.mxu0 %v704
    %v773 = vpop.f32.mrf.mxu0
    %v774 = vadd.f32 0.0, %v773
    %v775 = vpop.f32.mrf.mxu0
    %v776 = vadd.f32 0.0, %v775
    %777 = vdwg.mxu0
    %778 = vmatprep.subr.mxu0 %v109
    %779 = vmatpush1.msra.mxu0 %v108
    %780 = vmatprep.subr.mxu0 %v105
    %781 = vmatpush1.msra.mxu0 %v104
    %782 = vmatprep.subr.mxu0 %v101
    %783 = vmatpush1.msra.mxu0 %v100
    %784 = vmatprep.subr.mxu0 %v97
    %785 = vmatpush1.msra.mxu0 %v96
    %786 = vmatprep.subr.mxu0 %v93
    %787 = vmatpush1.msra.mxu0 %v92
    %788 = vmatprep.subr.mxu0 %v89
    %789 = vmatpush1.msra.mxu0 %v88
    %790 = vmatprep.subr.mxu0 %v85
    %791 = vmatpush1.msra.mxu0 %v84
    %792 = vmatprep.subr.mxu0 %v81
    %793 = vmatpush1.msra.mxu0 %v80
    %794 = vmatprep.subr.mxu0 %v77
    %795 = vmatpush1.msra.mxu0 %v76
    %796 = vmatprep.subr.mxu0 %v73
    %797 = vmatpush1.msra.mxu0 %v72
    %798 = vmatprep.subr.mxu0 %v69
    %799 = vmatpush1.msra.mxu0 %v68
    %800 = vmatprep.subr.mxu0 %v65
    %801 = vmatpush1.msra.mxu0 %v64
    %802 = vmatprep.subr.mxu0 %v61
    %803 = vmatpush1.msra.mxu0 %v60
    %804 = vmatprep.subr.mxu0 %v57
    %805 = vmatpush1.msra.mxu0 %v56
    %806 = vmatprep.subr.mxu0 %v53
    %807 = vmatpush1.msra.mxu0 %v52
    %808 = vmatprep.subr.mxu0 %v49
    %809 = vmatpush1.msra.mxu0 %v48
    %810 = vmatprep.subr.mxu0 0.0
    %811 = vmatpush2.msra.mxu0 0.0
    %812 = vmatprep.subr.mxu0 0.0
    %813 = vmatpush2.msra.mxu0 0.0
    %814 = vmatprep.subr.mxu0 0.0
    %815 = vmatpush2.msra.mxu0 0.0
    %816 = vmatprep.subr.mxu0 0.0
    %817 = vmatpush2.msra.mxu0 0.0
    %818 = vmatprep.subr.mxu0 0.0
    %819 = vmatpush2.msra.mxu0 0.0
    %820 = vmatprep.subr.mxu0 0.0
    %821 = vmatpush2.msra.mxu0 0.0
    %822 = vmatprep.subr.mxu0 0.0
    %823 = vmatpush2.msra.mxu0 0.0
    %824 = vmatprep.subr.mxu0 0.0
    %825 = vmatpush2.msra.mxu0 0.0
    %826 = vmatprep.subr.mxu0 0.0
    %827 = vmatpush2.msra.mxu0 0.0
    %828 = vmatprep.subr.mxu0 0.0
    %829 = vmatpush2.msra.mxu0 0.0
    %830 = vmatprep.subr.mxu0 0.0
    %831 = vmatpush2.msra.mxu0 0.0
    %832 = vmatprep.subr.mxu0 0.0
    %833 = vmatpush2.msra.mxu0 0.0
    %834 = vmatprep.subr.mxu0 0.0
    %835 = vmatpush2.msra.mxu0 0.0
    %836 = vmatprep.subr.mxu0 0.0
    %837 = vmatpush2.msra.mxu0 0.0
    %838 = vmatprep.subr.mxu0 0.0
    %839 = vmatpush2.msra.mxu0 0.0
    %840 = vmatprep.subr.mxu0 0.0
    %841 = vmatpush2.msra.mxu0 0.0
    %842 = vmatprep.mubr.f32.mxu0 0.0
    %843 = vmatmul.mubr.f32.gmra.mxu0 %v704
    %v844 = vpop.f32.mrf.mxu0
    %v845 = vadd.f32 0.0, %v844
    %v846 = vpop.f32.mrf.mxu0
    %v847 = vadd.f32 0.0, %v846
    %848 = vdwg.mxu0
    %v853 = vcombine.low %v774, %v776
    %v854 = vcombine.low %v845, %v847
    %v856 = vunpack.c.l.s4 1983009808
    %v857 = vunpack.c.0.s8 %v856
    %v858 = vlaneseq
    %v859 = vshrl.u32 %v858, 7
    %v860 = vsub.s32 %v857, %v859
    %v861 = vrot.slane %v853, %v860
    %v863 = vunpack.c.l.s4 1983009808
    %v864 = vunpack.c.0.s8 %v863
    %v865 = vlaneseq
    %v866 = vshrl.u32 %v865, 7
    %v867 = vsub.s32 %v864, %v866
    %v868 = vrot.slane %v854, %v867
    %v869 = vcombine.low %v861, %v868
    %v871 = vadd.f32 %v706, %v869
    %v872 = vxor.u32 %v871, 2147483648
    %v873 = vmul.f32 %v872, 1.442695
    %v874 = vpow.pop %v873
    %v875 = vadd.f32 %v874, 1.0
    %v876 = vrcp.pop %v875
    %v877 = vmul.f32 1.0, %v876
    %v879 = vrot.slane %v871, 2
    %v881 = vxor.u32 %v879, 2147483648
    %v882 = vmul.f32 %v881, 1.442695
    %v883 = vpow.pop %v882
    %v884 = vadd.f32 %v883, 1.0
    %v885 = vrcp.pop %v884
    %v886 = vmul.f32 1.0, %v885
    %v887 = vrot.slane %v871, 4
    %v889 = vtanh.pop %v887
    %v890 = vrot.slane %v871, 6
    %v892 = vxor.u32 %v890, 2147483648
    %v893 = vmul.f32 %v892, 1.442695
    %v894 = vpow.pop %v893
    %v895 = vadd.f32 %v894, 1.0
    %v896 = vrcp.pop %v895
    %v897 = vmul.f32 1.0, %v896
    %v898 = vmul.f32 %v886, %v702
    %v899 = vmul.f32 %v877, %v889
    %v900 = vadd.f32 %v898, %v899
    %v901 = vtanh.pop %v900
    %v902 = vmul.f32 %v897, %v901
    %s903 = scalar_lea.vmem [#allocation4], 32
    %v904 = vld [vmem:[%s903] sm:$0xff]
    %905 = vmatprep.subr.mxu0 %v107
    %906 = vmatpush1.msra.mxu0 %v106
    %907 = vmatprep.subr.mxu0 %v103
    %908 = vmatpush1.msra.mxu0 %v102
    %909 = vmatprep.subr.mxu0 %v99
    %910 = vmatpush1.msra.mxu0 %v98
    %911 = vmatprep.subr.mxu0 %v95
    %912 = vmatpush1.msra.mxu0 %v94
    %913 = vmatprep.subr.mxu0 %v91
    %914 = vmatpush1.msra.mxu0 %v90
    %915 = vmatprep.subr.mxu0 %v87
    %916 = vmatpush1.msra.mxu0 %v86
    %917 = vmatprep.subr.mxu0 %v83
    %918 = vmatpush1.msra.mxu0 %v82
    %919 = vmatprep.subr.mxu0 %v79
    %920 = vmatpush1.msra.mxu0 %v78
    %921 = vmatprep.subr.mxu0 %v75
    %922 = vmatpush1.msra.mxu0 %v74
    %923 = vmatprep.subr.mxu0 %v71
    %924 = vmatpush1.msra.mxu0 %v70
    %925 = vmatprep.subr.mxu0 %v67
    %926 = vmatpush1.msra.mxu0 %v66
    %927 = vmatprep.subr.mxu0 %v63
    %928 = vmatpush1.msra.mxu0 %v62
    %929 = vmatprep.subr.mxu0 %v59
    %930 = vmatpush1.msra.mxu0 %v58
    %931 = vmatprep.subr.mxu0 %v55
    %932 = vmatpush1.msra.mxu0 %v54
    %933 = vmatprep.subr.mxu0 %v51
    %934 = vmatpush1.msra.mxu0 %v50
    %935 = vmatprep.subr.mxu0 %v47
    %936 = vmatpush1.msra.mxu0 %v46
    %937 = vmatprep.subr.mxu0 0.0
    %938 = vmatpush2.msra.mxu0 0.0
    %939 = vmatprep.subr.mxu0 0.0
    %940 = vmatpush2.msra.mxu0 0.0
    %941 = vmatprep.subr.mxu0 0.0
    %942 = vmatpush2.msra.mxu0 0.0
    %943 = vmatprep.subr.mxu0 0.0
    %944 = vmatpush2.msra.mxu0 0.0
    %945 = vmatprep.subr.mxu0 0.0
    %946 = vmatpush2.msra.mxu0 0.0
    %947 = vmatprep.subr.mxu0 0.0
    %948 = vmatpush2.msra.mxu0 0.0
    %949 = vmatprep.subr.mxu0 0.0
    %950 = vmatpush2.msra.mxu0 0.0
    %951 = vmatprep.subr.mxu0 0.0
    %952 = vmatpush2.msra.mxu0 0.0
    %953 = vmatprep.subr.mxu0 0.0
    %954 = vmatpush2.msra.mxu0 0.0
    %955 = vmatprep.subr.mxu0 0.0
    %956 = vmatpush2.msra.mxu0 0.0
    %957 = vmatprep.subr.mxu0 0.0
    %958 = vmatpush2.msra.mxu0 0.0
    %959 = vmatprep.subr.mxu0 0.0
    %960 = vmatpush2.msra.mxu0 0.0
    %961 = vmatprep.subr.mxu0 0.0
    %962 = vmatpush2.msra.mxu0 0.0
    %963 = vmatprep.subr.mxu0 0.0
    %964 = vmatpush2.msra.mxu0 0.0
    %965 = vmatprep.subr.mxu0 0.0
    %966 = vmatpush2.msra.mxu0 0.0
    %967 = vmatprep.subr.mxu0 0.0
    %968 = vmatpush2.msra.mxu0 0.0
    %969 = vmatprep.mubr.f32.mxu0 0.0
    %970 = vmatmul.mubr.f32.gmra.mxu0 %v902
    %v971 = vpop.f32.mrf.mxu0
    %v972 = vadd.f32 0.0, %v971
    %v973 = vpop.f32.mrf.mxu0
    %v974 = vadd.f32 0.0, %v973
    %975 = vdwg.mxu0
    %976 = vmatprep.subr.mxu0 %v109
    %977 = vmatpush1.msra.mxu0 %v108
    %978 = vmatprep.subr.mxu0 %v105
    %979 = vmatpush1.msra.mxu0 %v104
    %980 = vmatprep.subr.mxu0 %v101
    %981 = vmatpush1.msra.mxu0 %v100
    %982 = vmatprep.subr.mxu0 %v97
    %983 = vmatpush1.msra.mxu0 %v96
    %984 = vmatprep.subr.mxu0 %v93
    %985 = vmatpush1.msra.mxu0 %v92
    %986 = vmatprep.subr.mxu0 %v89
    %987 = vmatpush1.msra.mxu0 %v88
    %988 = vmatprep.subr.mxu0 %v85
    %989 = vmatpush1.msra.mxu0 %v84
    %990 = vmatprep.subr.mxu0 %v81
    %991 = vmatpush1.msra.mxu0 %v80
    %992 = vmatprep.subr.mxu0 %v77
    %993 = vmatpush1.msra.mxu0 %v76
    %994 = vmatprep.subr.mxu0 %v73
    %995 = vmatpush1.msra.mxu0 %v72
    %996 = vmatprep.subr.mxu0 %v69
    %997 = vmatpush1.msra.mxu0 %v68
    %998 = vmatprep.subr.mxu0 %v65
    %999 = vmatpush1.msra.mxu0 %v64
    %1000 = vmatprep.subr.mxu0 %v61
    %1001 = vmatpush1.msra.mxu0 %v60
    %1002 = vmatprep.subr.mxu0 %v57
    %1003 = vmatpush1.msra.mxu0 %v56
    %1004 = vmatprep.subr.mxu0 %v53
    %1005 = vmatpush1.msra.mxu0 %v52
    %1006 = vmatprep.subr.mxu0 %v49
    %1007 = vmatpush1.msra.mxu0 %v48
    %1008 = vmatprep.subr.mxu0 0.0
    %1009 = vmatpush2.msra.mxu0 0.0
    %1010 = vmatprep.subr.mxu0 0.0
    %1011 = vmatpush2.msra.mxu0 0.0
    %1012 = vmatprep.subr.mxu0 0.0
    %1013 = vmatpush2.msra.mxu0 0.0
    %1014 = vmatprep.subr.mxu0 0.0
    %1015 = vmatpush2.msra.mxu0 0.0
    %1016 = vmatprep.subr.mxu0 0.0
    %1017 = vmatpush2.msra.mxu0 0.0
    %1018 = vmatprep.subr.mxu0 0.0
    %1019 = vmatpush2.msra.mxu0 0.0
    %1020 = vmatprep.subr.mxu0 0.0
    %1021 = vmatpush2.msra.mxu0 0.0
    %1022 = vmatprep.subr.mxu0 0.0
    %1023 = vmatpush2.msra.mxu0 0.0
    %1024 = vmatprep.subr.mxu0 0.0
    %1025 = vmatpush2.msra.mxu0 0.0
    %1026 = vmatprep.subr.mxu0 0.0
    %1027 = vmatpush2.msra.mxu0 0.0
    %1028 = vmatprep.subr.mxu0 0.0
    %1029 = vmatpush2.msra.mxu0 0.0
    %1030 = vmatprep.subr.mxu0 0.0
    %1031 = vmatpush2.msra.mxu0 0.0
    %1032 = vmatprep.subr.mxu0 0.0
    %1033 = vmatpush2.msra.mxu0 0.0
    %1034 = vmatprep.subr.mxu0 0.0
    %1035 = vmatpush2.msra.mxu0 0.0
    %1036 = vmatprep.subr.mxu0 0.0
    %1037 = vmatpush2.msra.mxu0 0.0
    %1038 = vmatprep.subr.mxu0 0.0
    %1039 = vmatpush2.msra.mxu0 0.0
    %1040 = vmatprep.mubr.f32.mxu0 0.0
    %1041 = vmatmul.mubr.f32.gmra.mxu0 %v902
    %v1042 = vpop.f32.mrf.mxu0
    %v1043 = vadd.f32 0.0, %v1042
    %v1044 = vpop.f32.mrf.mxu0
    %v1045 = vadd.f32 0.0, %v1044
    %1046 = vdwg.mxu0
    %v1051 = vcombine.low %v972, %v974
    %v1052 = vcombine.low %v1043, %v1045
    %v1054 = vunpack.c.l.s4 1983009808
    %v1055 = vunpack.c.0.s8 %v1054
    %v1056 = vlaneseq
    %v1057 = vshrl.u32 %v1056, 7
    %v1058 = vsub.s32 %v1055, %v1057
    %v1059 = vrot.slane %v1051, %v1058
    %v1061 = vunpack.c.l.s4 1983009808
    %v1062 = vunpack.c.0.s8 %v1061
    %v1063 = vlaneseq
    %v1064 = vshrl.u32 %v1063, 7
    %v1065 = vsub.s32 %v1062, %v1064
    %v1066 = vrot.slane %v1052, %v1065
    %v1067 = vcombine.low %v1059, %v1066
    %v1069 = vadd.f32 %v904, %v1067
    %v1070 = vxor.u32 %v1069, 2147483648
    %v1071 = vmul.f32 %v1070, 1.442695
    %v1072 = vpow.pop %v1071
    %v1073 = vadd.f32 %v1072, 1.0
    %v1074 = vrcp.pop %v1073
    %v1075 = vmul.f32 1.0, %v1074
    %v1077 = vrot.slane %v1069, 2
    %v1079 = vxor.u32 %v1077, 2147483648
    %v1080 = vmul.f32 %v1079, 1.442695
    %v1081 = vpow.pop %v1080
    %v1082 = vadd.f32 %v1081, 1.0
    %v1083 = vrcp.pop %v1082
    %v1084 = vmul.f32 1.0, %v1083
    %v1085 = vrot.slane %v1069, 4
    %v1087 = vtanh.pop %v1085
    %v1088 = vrot.slane %v1069, 6
    %v1090 = vxor.u32 %v1088, 2147483648
    %v1091 = vmul.f32 %v1090, 1.442695
    %v1092 = vpow.pop %v1091
    %v1093 = vadd.f32 %v1092, 1.0
    %v1094 = vrcp.pop %v1093
    %v1095 = vmul.f32 1.0, %v1094
    %v1096 = vmul.f32 %v1084, %v900
    %v1097 = vmul.f32 %v1075, %v1087
    %v1098 = vadd.f32 %v1096, %v1097
    %v1099 = vtanh.pop %v1098
    %v1100 = vmul.f32 %v1095, %v1099
    %s1101 = scalar_lea.vmem [#allocation4], 40
    %v1102 = vld [vmem:[%s1101] sm:$0xff]
    %1103 = vmatprep.subr.mxu0 %v107
    %1104 = vmatpush1.msra.mxu0 %v106
    %1105 = vmatprep.subr.mxu0 %v103
    %1106 = vmatpush1.msra.mxu0 %v102
    %1107 = vmatprep.subr.mxu0 %v99
    %1108 = vmatpush1.msra.mxu0 %v98
    %1109 = vmatprep.subr.mxu0 %v95
    %1110 = vmatpush1.msra.mxu0 %v94
    %1111 = vmatprep.subr.mxu0 %v91
    %1112 = vmatpush1.msra.mxu0 %v90
    %1113 = vmatprep.subr.mxu0 %v87
    %1114 = vmatpush1.msra.mxu0 %v86
    %1115 = vmatprep.subr.mxu0 %v83
    %1116 = vmatpush1.msra.mxu0 %v82
    %1117 = vmatprep.subr.mxu0 %v79
    %1118 = vmatpush1.msra.mxu0 %v78
    %1119 = vmatprep.subr.mxu0 %v75
    %1120 = vmatpush1.msra.mxu0 %v74
    %1121 = vmatprep.subr.mxu0 %v71
    %1122 = vmatpush1.msra.mxu0 %v70
    %1123 = vmatprep.subr.mxu0 %v67
    %1124 = vmatpush1.msra.mxu0 %v66
    %1125 = vmatprep.subr.mxu0 %v63
    %1126 = vmatpush1.msra.mxu0 %v62
    %1127 = vmatprep.subr.mxu0 %v59
    %1128 = vmatpush1.msra.mxu0 %v58
    %1129 = vmatprep.subr.mxu0 %v55
    %1130 = vmatpush1.msra.mxu0 %v54
    %1131 = vmatprep.subr.mxu0 %v51
    %1132 = vmatpush1.msra.mxu0 %v50
    %1133 = vmatprep.subr.mxu0 %v47
    %1134 = vmatpush1.msra.mxu0 %v46
    %1135 = vmatprep.subr.mxu0 0.0
    %1136 = vmatpush2.msra.mxu0 0.0
    %1137 = vmatprep.subr.mxu0 0.0
    %1138 = vmatpush2.msra.mxu0 0.0
    %1139 = vmatprep.subr.mxu0 0.0
    %1140 = vmatpush2.msra.mxu0 0.0
    %1141 = vmatprep.subr.mxu0 0.0
    %1142 = vmatpush2.msra.mxu0 0.0
    %1143 = vmatprep.subr.mxu0 0.0
    %1144 = vmatpush2.msra.mxu0 0.0
    %1145 = vmatprep.subr.mxu0 0.0
    %1146 = vmatpush2.msra.mxu0 0.0
    %1147 = vmatprep.subr.mxu0 0.0
    %1148 = vmatpush2.msra.mxu0 0.0
    %1149 = vmatprep.subr.mxu0 0.0
    %1150 = vmatpush2.msra.mxu0 0.0
    %1151 = vmatprep.subr.mxu0 0.0
    %1152 = vmatpush2.msra.mxu0 0.0
    %1153 = vmatprep.subr.mxu0 0.0
    %1154 = vmatpush2.msra.mxu0 0.0
    %1155 = vmatprep.subr.mxu0 0.0
    %1156 = vmatpush2.msra.mxu0 0.0
    %1157 = vmatprep.subr.mxu0 0.0
    %1158 = vmatpush2.msra.mxu0 0.0
    %1159 = vmatprep.subr.mxu0 0.0
    %1160 = vmatpush2.msra.mxu0 0.0
    %1161 = vmatprep.subr.mxu0 0.0
    %1162 = vmatpush2.msra.mxu0 0.0
    %1163 = vmatprep.subr.mxu0 0.0
    %1164 = vmatpush2.msra.mxu0 0.0
    %1165 = vmatprep.subr.mxu0 0.0
    %1166 = vmatpush2.msra.mxu0 0.0
    %1167 = vmatprep.mubr.f32.mxu0 0.0
    %1168 = vmatmul.mubr.f32.gmra.mxu0 %v1100
    %v1169 = vpop.f32.mrf.mxu0
    %v1170 = vadd.f32 0.0, %v1169
    %v1171 = vpop.f32.mrf.mxu0
    %v1172 = vadd.f32 0.0, %v1171
    %1173 = vdwg.mxu0
    %1174 = vmatprep.subr.mxu0 %v109
    %1175 = vmatpush1.msra.mxu0 %v108
    %1176 = vmatprep.subr.mxu0 %v105
    %1177 = vmatpush1.msra.mxu0 %v104
    %1178 = vmatprep.subr.mxu0 %v101
    %1179 = vmatpush1.msra.mxu0 %v100
    %1180 = vmatprep.subr.mxu0 %v97
    %1181 = vmatpush1.msra.mxu0 %v96
    %1182 = vmatprep.subr.mxu0 %v93
    %1183 = vmatpush1.msra.mxu0 %v92
    %1184 = vmatprep.subr.mxu0 %v89
    %1185 = vmatpush1.msra.mxu0 %v88
    %1186 = vmatprep.subr.mxu0 %v85
    %1187 = vmatpush1.msra.mxu0 %v84
    %1188 = vmatprep.subr.mxu0 %v81
    %1189 = vmatpush1.msra.mxu0 %v80
    %1190 = vmatprep.subr.mxu0 %v77
    %1191 = vmatpush1.msra.mxu0 %v76
    %1192 = vmatprep.subr.mxu0 %v73
    %1193 = vmatpush1.msra.mxu0 %v72
    %1194 = vmatprep.subr.mxu0 %v69
    %1195 = vmatpush1.msra.mxu0 %v68
    %1196 = vmatprep.subr.mxu0 %v65
    %1197 = vmatpush1.msra.mxu0 %v64
    %1198 = vmatprep.subr.mxu0 %v61
    %1199 = vmatpush1.msra.mxu0 %v60
    %1200 = vmatprep.subr.mxu0 %v57
    %1201 = vmatpush1.msra.mxu0 %v56
    %1202 = vmatprep.subr.mxu0 %v53
    %1203 = vmatpush1.msra.mxu0 %v52
    %1204 = vmatprep.subr.mxu0 %v49
    %1205 = vmatpush1.msra.mxu0 %v48
    %1206 = vmatprep.subr.mxu0 0.0
    %1207 = vmatpush2.msra.mxu0 0.0
    %1208 = vmatprep.subr.mxu0 0.0
    %1209 = vmatpush2.msra.mxu0 0.0
    %1210 = vmatprep.subr.mxu0 0.0
    %1211 = vmatpush2.msra.mxu0 0.0
    %1212 = vmatprep.subr.mxu0 0.0
    %1213 = vmatpush2.msra.mxu0 0.0
    %1214 = vmatprep.subr.mxu0 0.0
    %1215 = vmatpush2.msra.mxu0 0.0
    %1216 = vmatprep.subr.mxu0 0.0
    %1217 = vmatpush2.msra.mxu0 0.0
    %1218 = vmatprep.subr.mxu0 0.0
    %1219 = vmatpush2.msra.mxu0 0.0
    %1220 = vmatprep.subr.mxu0 0.0
    %1221 = vmatpush2.msra.mxu0 0.0
    %1222 = vmatprep.subr.mxu0 0.0
    %1223 = vmatpush2.msra.mxu0 0.0
    %1224 = vmatprep.subr.mxu0 0.0
    %1225 = vmatpush2.msra.mxu0 0.0
    %1226 = vmatprep.subr.mxu0 0.0
    %1227 = vmatpush2.msra.mxu0 0.0
    %1228 = vmatprep.subr.mxu0 0.0
    %1229 = vmatpush2.msra.mxu0 0.0
    %1230 = vmatprep.subr.mxu0 0.0
    %1231 = vmatpush2.msra.mxu0 0.0
    %1232 = vmatprep.subr.mxu0 0.0
    %1233 = vmatpush2.msra.mxu0 0.0
    %1234 = vmatprep.subr.mxu0 0.0
    %1235 = vmatpush2.msra.mxu0 0.0
    %1236 = vmatprep.subr.mxu0 0.0
    %1237 = vmatpush2.msra.mxu0 0.0
    %1238 = vmatprep.mubr.f32.mxu0 0.0
    %1239 = vmatmul.mubr.f32.gmra.mxu0 %v1100
    %v1240 = vpop.f32.mrf.mxu0
    %v1241 = vadd.f32 0.0, %v1240
    %v1242 = vpop.f32.mrf.mxu0
    %v1243 = vadd.f32 0.0, %v1242
    %1244 = vdwg.mxu0
    %v1249 = vcombine.low %v1170, %v1172
    %v1250 = vcombine.low %v1241, %v1243
    %v1252 = vunpack.c.l.s4 1983009808
    %v1253 = vunpack.c.0.s8 %v1252
    %v1254 = vlaneseq
    %v1255 = vshrl.u32 %v1254, 7
    %v1256 = vsub.s32 %v1253, %v1255
    %v1257 = vrot.slane %v1249, %v1256
    %v1259 = vunpack.c.l.s4 1983009808
    %v1260 = vunpack.c.0.s8 %v1259
    %v1261 = vlaneseq
    %v1262 = vshrl.u32 %v1261, 7
    %v1263 = vsub.s32 %v1260, %v1262
    %v1264 = vrot.slane %v1250, %v1263
    %v1265 = vcombine.low %v1257, %v1264
    %v1267 = vadd.f32 %v1102, %v1265
    %v1268 = vxor.u32 %v1267, 2147483648
    %v1269 = vmul.f32 %v1268, 1.442695
    %v1270 = vpow.pop %v1269
    %v1271 = vadd.f32 %v1270, 1.0
    %v1272 = vrcp.pop %v1271
    %v1273 = vmul.f32 1.0, %v1272
    %v1275 = vrot.slane %v1267, 2
    %v1277 = vxor.u32 %v1275, 2147483648
    %v1278 = vmul.f32 %v1277, 1.442695
    %v1279 = vpow.pop %v1278
    %v1280 = vadd.f32 %v1279, 1.0
    %v1281 = vrcp.pop %v1280
    %v1282 = vmul.f32 1.0, %v1281
    %v1283 = vrot.slane %v1267, 4
    %v1285 = vtanh.pop %v1283
    %v1286 = vrot.slane %v1267, 6
    %v1288 = vxor.u32 %v1286, 2147483648
    %v1289 = vmul.f32 %v1288, 1.442695
    %v1290 = vpow.pop %v1289
    %v1291 = vadd.f32 %v1290, 1.0
    %v1292 = vrcp.pop %v1291
    %v1293 = vmul.f32 1.0, %v1292
    %v1294 = vmul.f32 %v1282, %v1098
    %v1295 = vmul.f32 %v1273, %v1285
    %v1296 = vadd.f32 %v1294, %v1295
    %v1297 = vtanh.pop %v1296
    %v1298 = vmul.f32 %v1293, %v1297
    %s1299 = scalar_lea.vmem [#allocation4], 48
    %v1300 = vld [vmem:[%s1299] sm:$0xff]
    %1301 = vmatprep.subr.mxu0 %v107
    %1302 = vmatpush1.msra.mxu0 %v106
    %1303 = vmatprep.subr.mxu0 %v103
    %1304 = vmatpush1.msra.mxu0 %v102
    %1305 = vmatprep.subr.mxu0 %v99
    %1306 = vmatpush1.msra.mxu0 %v98
    %1307 = vmatprep.subr.mxu0 %v95
    %1308 = vmatpush1.msra.mxu0 %v94
    %1309 = vmatprep.subr.mxu0 %v91
    %1310 = vmatpush1.msra.mxu0 %v90
    %1311 = vmatprep.subr.mxu0 %v87
    %1312 = vmatpush1.msra.mxu0 %v86
    %1313 = vmatprep.subr.mxu0 %v83
    %1314 = vmatpush1.msra.mxu0 %v82
    %1315 = vmatprep.subr.mxu0 %v79
    %1316 = vmatpush1.msra.mxu0 %v78
    %1317 = vmatprep.subr.mxu0 %v75
    %1318 = vmatpush1.msra.mxu0 %v74
    %1319 = vmatprep.subr.mxu0 %v71
    %1320 = vmatpush1.msra.mxu0 %v70
    %1321 = vmatprep.subr.mxu0 %v67
    %1322 = vmatpush1.msra.mxu0 %v66
    %1323 = vmatprep.subr.mxu0 %v63
    %1324 = vmatpush1.msra.mxu0 %v62
    %1325 = vmatprep.subr.mxu0 %v59
    %1326 = vmatpush1.msra.mxu0 %v58
    %1327 = vmatprep.subr.mxu0 %v55
    %1328 = vmatpush1.msra.mxu0 %v54
    %1329 = vmatprep.subr.mxu0 %v51
    %1330 = vmatpush1.msra.mxu0 %v50
    %1331 = vmatprep.subr.mxu0 %v47
    %1332 = vmatpush1.msra.mxu0 %v46
    %1333 = vmatprep.subr.mxu0 0.0
    %1334 = vmatpush2.msra.mxu0 0.0
    %1335 = vmatprep.subr.mxu0 0.0
    %1336 = vmatpush2.msra.mxu0 0.0
    %1337 = vmatprep.subr.mxu0 0.0
    %1338 = vmatpush2.msra.mxu0 0.0
    %1339 = vmatprep.subr.mxu0 0.0
    %1340 = vmatpush2.msra.mxu0 0.0
    %1341 = vmatprep.subr.mxu0 0.0
    %1342 = vmatpush2.msra.mxu0 0.0
    %1343 = vmatprep.subr.mxu0 0.0
    %1344 = vmatpush2.msra.mxu0 0.0
    %1345 = vmatprep.subr.mxu0 0.0
    %1346 = vmatpush2.msra.mxu0 0.0
    %1347 = vmatprep.subr.mxu0 0.0
    %1348 = vmatpush2.msra.mxu0 0.0
    %1349 = vmatprep.subr.mxu0 0.0
    %1350 = vmatpush2.msra.mxu0 0.0
    %1351 = vmatprep.subr.mxu0 0.0
    %1352 = vmatpush2.msra.mxu0 0.0
    %1353 = vmatprep.subr.mxu0 0.0
    %1354 = vmatpush2.msra.mxu0 0.0
    %1355 = vmatprep.subr.mxu0 0.0
    %1356 = vmatpush2.msra.mxu0 0.0
    %1357 = vmatprep.subr.mxu0 0.0
    %1358 = vmatpush2.msra.mxu0 0.0
    %1359 = vmatprep.subr.mxu0 0.0
    %1360 = vmatpush2.msra.mxu0 0.0
    %1361 = vmatprep.subr.mxu0 0.0
    %1362 = vmatpush2.msra.mxu0 0.0
    %1363 = vmatprep.subr.mxu0 0.0
    %1364 = vmatpush2.msra.mxu0 0.0
    %1365 = vmatprep.mubr.f32.mxu0 0.0
    %1366 = vmatmul.mubr.f32.gmra.mxu0 %v1298
    %v1367 = vpop.f32.mrf.mxu0
    %v1368 = vadd.f32 0.0, %v1367
    %v1369 = vpop.f32.mrf.mxu0
    %v1370 = vadd.f32 0.0, %v1369
    %1371 = vdwg.mxu0
    %1372 = vmatprep.subr.mxu0 %v109
    %1373 = vmatpush1.msra.mxu0 %v108
    %1374 = vmatprep.subr.mxu0 %v105
    %1375 = vmatpush1.msra.mxu0 %v104
    %1376 = vmatprep.subr.mxu0 %v101
    %1377 = vmatpush1.msra.mxu0 %v100
    %1378 = vmatprep.subr.mxu0 %v97
    %1379 = vmatpush1.msra.mxu0 %v96
    %1380 = vmatprep.subr.mxu0 %v93
    %1381 = vmatpush1.msra.mxu0 %v92
    %1382 = vmatprep.subr.mxu0 %v89
    %1383 = vmatpush1.msra.mxu0 %v88
    %1384 = vmatprep.subr.mxu0 %v85
    %1385 = vmatpush1.msra.mxu0 %v84
    %1386 = vmatprep.subr.mxu0 %v81
    %1387 = vmatpush1.msra.mxu0 %v80
    %1388 = vmatprep.subr.mxu0 %v77
    %1389 = vmatpush1.msra.mxu0 %v76
    %1390 = vmatprep.subr.mxu0 %v73
    %1391 = vmatpush1.msra.mxu0 %v72
    %1392 = vmatprep.subr.mxu0 %v69
    %1393 = vmatpush1.msra.mxu0 %v68
    %1394 = vmatprep.subr.mxu0 %v65
    %1395 = vmatpush1.msra.mxu0 %v64
    %1396 = vmatprep.subr.mxu0 %v61
    %1397 = vmatpush1.msra.mxu0 %v60
    %1398 = vmatprep.subr.mxu0 %v57
    %1399 = vmatpush1.msra.mxu0 %v56
    %1400 = vmatprep.subr.mxu0 %v53
    %1401 = vmatpush1.msra.mxu0 %v52
    %1402 = vmatprep.subr.mxu0 %v49
    %1403 = vmatpush1.msra.mxu0 %v48
    %1404 = vmatprep.subr.mxu0 0.0
    %1405 = vmatpush2.msra.mxu0 0.0
    %1406 = vmatprep.subr.mxu0 0.0
    %1407 = vmatpush2.msra.mxu0 0.0
    %1408 = vmatprep.subr.mxu0 0.0
    %1409 = vmatpush2.msra.mxu0 0.0
    %1410 = vmatprep.subr.mxu0 0.0
    %1411 = vmatpush2.msra.mxu0 0.0
    %1412 = vmatprep.subr.mxu0 0.0
    %1413 = vmatpush2.msra.mxu0 0.0
    %1414 = vmatprep.subr.mxu0 0.0
    %1415 = vmatpush2.msra.mxu0 0.0
    %1416 = vmatprep.subr.mxu0 0.0
    %1417 = vmatpush2.msra.mxu0 0.0
    %1418 = vmatprep.subr.mxu0 0.0
    %1419 = vmatpush2.msra.mxu0 0.0
    %1420 = vmatprep.subr.mxu0 0.0
    %1421 = vmatpush2.msra.mxu0 0.0
    %1422 = vmatprep.subr.mxu0 0.0
    %1423 = vmatpush2.msra.mxu0 0.0
    %1424 = vmatprep.subr.mxu0 0.0
    %1425 = vmatpush2.msra.mxu0 0.0
    %1426 = vmatprep.subr.mxu0 0.0
    %1427 = vmatpush2.msra.mxu0 0.0
    %1428 = vmatprep.subr.mxu0 0.0
    %1429 = vmatpush2.msra.mxu0 0.0
    %1430 = vmatprep.subr.mxu0 0.0
    %1431 = vmatpush2.msra.mxu0 0.0
    %1432 = vmatprep.subr.mxu0 0.0
    %1433 = vmatpush2.msra.mxu0 0.0
    %1434 = vmatprep.subr.mxu0 0.0
    %1435 = vmatpush2.msra.mxu0 0.0
    %1436 = vmatprep.mubr.f32.mxu0 0.0
    %1437 = vmatmul.mubr.f32.gmra.mxu0 %v1298
    %v1438 = vpop.f32.mrf.mxu0
    %v1439 = vadd.f32 0.0, %v1438
    %v1440 = vpop.f32.mrf.mxu0
    %v1441 = vadd.f32 0.0, %v1440
    %1442 = vdwg.mxu0
    %v1447 = vcombine.low %v1368, %v1370
    %v1448 = vcombine.low %v1439, %v1441
    %v1450 = vunpack.c.l.s4 1983009808
    %v1451 = vunpack.c.0.s8 %v1450
    %v1452 = vlaneseq
    %v1453 = vshrl.u32 %v1452, 7
    %v1454 = vsub.s32 %v1451, %v1453
    %v1455 = vrot.slane %v1447, %v1454
    %v1457 = vunpack.c.l.s4 1983009808
    %v1458 = vunpack.c.0.s8 %v1457
    %v1459 = vlaneseq
    %v1460 = vshrl.u32 %v1459, 7
    %v1461 = vsub.s32 %v1458, %v1460
    %v1462 = vrot.slane %v1448, %v1461
    %v1463 = vcombine.low %v1455, %v1462
    %v1465 = vadd.f32 %v1300, %v1463
    %v1466 = vxor.u32 %v1465, 2147483648
    %v1467 = vmul.f32 %v1466, 1.442695
    %v1468 = vpow.pop %v1467
    %v1469 = vadd.f32 %v1468, 1.0
    %v1470 = vrcp.pop %v1469
    %v1471 = vmul.f32 1.0, %v1470
    %v1473 = vrot.slane %v1465, 2
    %v1475 = vxor.u32 %v1473, 2147483648
    %v1476 = vmul.f32 %v1475, 1.442695
    %v1477 = vpow.pop %v1476
    %v1478 = vadd.f32 %v1477, 1.0
    %v1479 = vrcp.pop %v1478
    %v1480 = vmul.f32 1.0, %v1479
    %v1481 = vrot.slane %v1465, 4
    %v1483 = vtanh.pop %v1481
    %v1484 = vrot.slane %v1465, 6
    %v1486 = vxor.u32 %v1484, 2147483648
    %v1487 = vmul.f32 %v1486, 1.442695
    %v1488 = vpow.pop %v1487
    %v1489 = vadd.f32 %v1488, 1.0
    %v1490 = vrcp.pop %v1489
    %v1491 = vmul.f32 1.0, %v1490
    %v1492 = vmul.f32 %v1480, %v1296
    %v1493 = vmul.f32 %v1471, %v1483
    %v1494 = vadd.f32 %v1492, %v1493
    %v1495 = vtanh.pop %v1494
    %v1496 = vmul.f32 %v1491, %v1495
    %s1497 = scalar_lea.vmem [#allocation4], 56
    %v1498 = vld [vmem:[%s1497] sm:$0xff]
    %1499 = vmatprep.subr.mxu0 %v107
    %1500 = vmatpush1.msra.mxu0 %v106
    %1501 = vmatprep.subr.mxu0 %v103
    %1502 = vmatpush1.msra.mxu0 %v102
    %1503 = vmatprep.subr.mxu0 %v99
    %1504 = vmatpush1.msra.mxu0 %v98
    %1505 = vmatprep.subr.mxu0 %v95
    %1506 = vmatpush1.msra.mxu0 %v94
    %1507 = vmatprep.subr.mxu0 %v91
    %1508 = vmatpush1.msra.mxu0 %v90
    %1509 = vmatprep.subr.mxu0 %v87
    %1510 = vmatpush1.msra.mxu0 %v86
    %1511 = vmatprep.subr.mxu0 %v83
    %1512 = vmatpush1.msra.mxu0 %v82
    %1513 = vmatprep.subr.mxu0 %v79
    %1514 = vmatpush1.msra.mxu0 %v78
    %1515 = vmatprep.subr.mxu0 %v75
    %1516 = vmatpush1.msra.mxu0 %v74
    %1517 = vmatprep.subr.mxu0 %v71
    %1518 = vmatpush1.msra.mxu0 %v70
    %1519 = vmatprep.subr.mxu0 %v67
    %1520 = vmatpush1.msra.mxu0 %v66
    %1521 = vmatprep.subr.mxu0 %v63
    %1522 = vmatpush1.msra.mxu0 %v62
    %1523 = vmatprep.subr.mxu0 %v59
    %1524 = vmatpush1.msra.mxu0 %v58
    %1525 = vmatprep.subr.mxu0 %v55
    %1526 = vmatpush1.msra.mxu0 %v54
    %1527 = vmatprep.subr.mxu0 %v51
    %1528 = vmatpush1.msra.mxu0 %v50
    %1529 = vmatprep.subr.mxu0 %v47
    %1530 = vmatpush1.msra.mxu0 %v46
    %1531 = vmatprep.subr.mxu0 0.0
    %1532 = vmatpush2.msra.mxu0 0.0
    %1533 = vmatprep.subr.mxu0 0.0
    %1534 = vmatpush2.msra.mxu0 0.0
    %1535 = vmatprep.subr.mxu0 0.0
    %1536 = vmatpush2.msra.mxu0 0.0
    %1537 = vmatprep.subr.mxu0 0.0
    %1538 = vmatpush2.msra.mxu0 0.0
    %1539 = vmatprep.subr.mxu0 0.0
    %1540 = vmatpush2.msra.mxu0 0.0
    %1541 = vmatprep.subr.mxu0 0.0
    %1542 = vmatpush2.msra.mxu0 0.0
    %1543 = vmatprep.subr.mxu0 0.0
    %1544 = vmatpush2.msra.mxu0 0.0
    %1545 = vmatprep.subr.mxu0 0.0
    %1546 = vmatpush2.msra.mxu0 0.0
    %1547 = vmatprep.subr.mxu0 0.0
    %1548 = vmatpush2.msra.mxu0 0.0
    %1549 = vmatprep.subr.mxu0 0.0
    %1550 = vmatpush2.msra.mxu0 0.0
    %1551 = vmatprep.subr.mxu0 0.0
    %1552 = vmatpush2.msra.mxu0 0.0
    %1553 = vmatprep.subr.mxu0 0.0
    %1554 = vmatpush2.msra.mxu0 0.0
    %1555 = vmatprep.subr.mxu0 0.0
    %1556 = vmatpush2.msra.mxu0 0.0
    %1557 = vmatprep.subr.mxu0 0.0
    %1558 = vmatpush2.msra.mxu0 0.0
    %1559 = vmatprep.subr.mxu0 0.0
    %1560 = vmatpush2.msra.mxu0 0.0
    %1561 = vmatprep.subr.mxu0 0.0
    %1562 = vmatpush2.msra.mxu0 0.0
    %1563 = vmatprep.mubr.f32.mxu0 0.0
    %1564 = vmatmul.mubr.f32.gmra.mxu0 %v1496
    %v1565 = vpop.f32.mrf.mxu0
    %v1566 = vadd.f32 0.0, %v1565
    %v1567 = vpop.f32.mrf.mxu0
    %v1568 = vadd.f32 0.0, %v1567
    %1569 = vdwg.mxu0
    %1570 = vmatprep.subr.mxu0 %v109
    %1571 = vmatpush1.msra.mxu0 %v108
    %1572 = vmatprep.subr.mxu0 %v105
    %1573 = vmatpush1.msra.mxu0 %v104
    %1574 = vmatprep.subr.mxu0 %v101
    %1575 = vmatpush1.msra.mxu0 %v100
    %1576 = vmatprep.subr.mxu0 %v97
    %1577 = vmatpush1.msra.mxu0 %v96
    %1578 = vmatprep.subr.mxu0 %v93
    %1579 = vmatpush1.msra.mxu0 %v92
    %1580 = vmatprep.subr.mxu0 %v89
    %1581 = vmatpush1.msra.mxu0 %v88
    %1582 = vmatprep.subr.mxu0 %v85
    %1583 = vmatpush1.msra.mxu0 %v84
    %1584 = vmatprep.subr.mxu0 %v81
    %1585 = vmatpush1.msra.mxu0 %v80
    %1586 = vmatprep.subr.mxu0 %v77
    %1587 = vmatpush1.msra.mxu0 %v76
    %1588 = vmatprep.subr.mxu0 %v73
    %1589 = vmatpush1.msra.mxu0 %v72
    %1590 = vmatprep.subr.mxu0 %v69
    %1591 = vmatpush1.msra.mxu0 %v68
    %1592 = vmatprep.subr.mxu0 %v65
    %1593 = vmatpush1.msra.mxu0 %v64
    %1594 = vmatprep.subr.mxu0 %v61
    %1595 = vmatpush1.msra.mxu0 %v60
    %1596 = vmatprep.subr.mxu0 %v57
    %1597 = vmatpush1.msra.mxu0 %v56
    %1598 = vmatprep.subr.mxu0 %v53
    %1599 = vmatpush1.msra.mxu0 %v52
    %1600 = vmatprep.subr.mxu0 %v49
    %1601 = vmatpush1.msra.mxu0 %v48
    %1602 = vmatprep.subr.mxu0 0.0
    %1603 = vmatpush2.msra.mxu0 0.0
    %1604 = vmatprep.subr.mxu0 0.0
    %1605 = vmatpush2.msra.mxu0 0.0
    %1606 = vmatprep.subr.mxu0 0.0
    %1607 = vmatpush2.msra.mxu0 0.0
    %1608 = vmatprep.subr.mxu0 0.0
    %1609 = vmatpush2.msra.mxu0 0.0
    %1610 = vmatprep.subr.mxu0 0.0
    %1611 = vmatpush2.msra.mxu0 0.0
    %1612 = vmatprep.subr.mxu0 0.0
    %1613 = vmatpush2.msra.mxu0 0.0
    %1614 = vmatprep.subr.mxu0 0.0
    %1615 = vmatpush2.msra.mxu0 0.0
    %1616 = vmatprep.subr.mxu0 0.0
    %1617 = vmatpush2.msra.mxu0 0.0
    %1618 = vmatprep.subr.mxu0 0.0
    %1619 = vmatpush2.msra.mxu0 0.0
    %1620 = vmatprep.subr.mxu0 0.0
    %1621 = vmatpush2.msra.mxu0 0.0
    %1622 = vmatprep.subr.mxu0 0.0
    %1623 = vmatpush2.msra.mxu0 0.0
    %1624 = vmatprep.subr.mxu0 0.0
    %1625 = vmatpush2.msra.mxu0 0.0
    %1626 = vmatprep.subr.mxu0 0.0
    %1627 = vmatpush2.msra.mxu0 0.0
    %1628 = vmatprep.subr.mxu0 0.0
    %1629 = vmatpush2.msra.mxu0 0.0
    %1630 = vmatprep.subr.mxu0 0.0
    %1631 = vmatpush2.msra.mxu0 0.0
    %1632 = vmatprep.subr.mxu0 0.0
    %1633 = vmatpush2.msra.mxu0 0.0
    %1634 = vmatprep.mubr.f32.mxu0 0.0
    %1635 = vmatmul.mubr.f32.gmra.mxu0 %v1496
    %v1636 = vpop.f32.mrf.mxu0
    %v1637 = vadd.f32 0.0, %v1636
    %v1638 = vpop.f32.mrf.mxu0
    %v1639 = vadd.f32 0.0, %v1638
    %1640 = vdwg.mxu0
    %v1645 = vcombine.low %v1566, %v1568
    %v1646 = vcombine.low %v1637, %v1639
    %v1648 = vunpack.c.l.s4 1983009808
    %v1649 = vunpack.c.0.s8 %v1648
    %v1650 = vlaneseq
    %v1651 = vshrl.u32 %v1650, 7
    %v1652 = vsub.s32 %v1649, %v1651
    %v1653 = vrot.slane %v1645, %v1652
    %v1655 = vunpack.c.l.s4 1983009808
    %v1656 = vunpack.c.0.s8 %v1655
    %v1657 = vlaneseq
    %v1658 = vshrl.u32 %v1657, 7
    %v1659 = vsub.s32 %v1656, %v1658
    %v1660 = vrot.slane %v1646, %v1659
    %v1661 = vcombine.low %v1653, %v1660
    %v1663 = vadd.f32 %v1498, %v1661
    %v1664 = vxor.u32 %v1663, 2147483648
    %v1665 = vmul.f32 %v1664, 1.442695
    %v1666 = vpow.pop %v1665
    %v1667 = vadd.f32 %v1666, 1.0
    %v1668 = vrcp.pop %v1667
    %v1669 = vmul.f32 1.0, %v1668
    %v1671 = vrot.slane %v1663, 2
    %v1673 = vxor.u32 %v1671, 2147483648
    %v1674 = vmul.f32 %v1673, 1.442695
    %v1675 = vpow.pop %v1674
    %v1676 = vadd.f32 %v1675, 1.0
    %v1677 = vrcp.pop %v1676
    %v1678 = vmul.f32 1.0, %v1677
    %v1679 = vrot.slane %v1663, 4
    %v1681 = vtanh.pop %v1679
    %v1682 = vrot.slane %v1663, 6
    %v1684 = vxor.u32 %v1682, 2147483648
    %v1685 = vmul.f32 %v1684, 1.442695
    %v1686 = vpow.pop %v1685
    %v1687 = vadd.f32 %v1686, 1.0
    %v1688 = vrcp.pop %v1687
    %v1689 = vmul.f32 1.0, %v1688
    %v1690 = vmul.f32 %v1678, %v1494
    %v1691 = vmul.f32 %v1669, %v1681
    %v1692 = vadd.f32 %v1690, %v1691
    %v1693 = vtanh.pop %v1692
    %v1694 = vmul.f32 %v1689, %v1693
    %1695 = vst [vmem:[#allocation2] sm:$0x3] %v1694
    %1696 = vst [vmem:[#allocation3] sm:$0x3] %v1692
    // Predicated region
    $region22: #{tpu_custom_call.1} parent=1 // pred_check
      %p1697 = pneg %p40
    $region23: #{tpu_custom_call.1} parent=1 // pred_check_branch
      %1699 = sbr.rel (%p1697) target = $region25
    $region24: #{tpu_custom_call.1} parent=1 // pred_region
      %1700 = vst [vmem:[#allocation9] sm:$0x3] %v1694
    $region25: #{tpu_custom_call.1} parent=1 // pred_fallthru
      _
    // Predicated region
    $region26: #{tpu_custom_call.1} parent=1 // pred_check
      _
    $region27: #{tpu_custom_call.1} parent=1 // pred_check_branch
      %1702 = sbr.rel (0) target = $region29
    $region28: #{tpu_custom_call.1} parent=1 // pred_region
      %s1704 = ssub.s32 32, 32
      %1705 = vsyncadd [#allocation6], %s1704
      %s1707 = sshll.u32 [#allocation9], 4
      %s1708 = int_to_ptr.vmem [resolvable:$true] %s1707
      %1710 = dma.vmem_to_hbm [thread:$0]  %s1708, 32, %s2, [#allocation6]
    $region29: #{tpu_custom_call.1} parent=1 // pred_fallthru
      _
    // Predicated region
    $region30: #{tpu_custom_call.1} parent=1 // pred_check
      _
    $region31: #{tpu_custom_call.1} parent=1 // pred_check_branch
      %1712 = sbr.rel (0) target = $region33
    $region32: #{tpu_custom_call.1} parent=1 // pred_region
      %1713 = dma.done [#allocation6], 32
    $region33: #{tpu_custom_call.1} parent=1 // pred_fallthru
      _
    %1714 = vsyncpa [#allocation5], 1
    %1715 = vsyncpa [#allocation8], 1
    %1716 = vsyncpa [#allocation6], 1

</llo_original>
